<compile_context>
chip_gen: v5e
topology: v5e:2x2
jax: 0.10.0
libtpu: 0.0.40
codegen_flags: <defaults>
</compile_context>

<pallas_src>
import math

import jax
import jax.numpy as jnp
from jax import lax
from jax.experimental import pallas as pl
from jax.experimental.pallas import tpu as pltpu

# ---------------- model hyperparameters (small, consistent with the module) ----
B = 2            # batch
S = 8            # sequence length
F = 16           # input_size
D = 32           # d_model
H = 4            # nhead
HD = D // H      # head dim
L = 2            # num_layers
FF = 64          # dim_feedforward
C = 8            # num_classes
EPS = 1e-5
SCALE = 1.0 / math.sqrt(HD)
LANES = 128
NEG_INF = -1e9


# ---------------- packed-parameter layout (static, shared by packer & kernel) ---
def _build_layout():
    entries = [("posb", B * S, D),          # tiled (pos + input-proj bias)
               ("amask", B * S, B * S),     # block-diagonal additive attn mask
               ("win", F, D)]
    for l in range(L):
        entries += [
            (f"wqkv{l}", D, 3 * D), (f"bqkv{l}", 1, 3 * D),
            (f"wo{l}", D, D), (f"bo{l}", 1, D),
            (f"ln1w{l}", 1, D), (f"ln1b{l}", 1, D),
            (f"ln2w{l}", 1, D), (f"ln2b{l}", 1, D),
            (f"w1{l}", D, FF), (f"b1{l}", 1, FF),
            (f"w2{l}", FF, D), (f"b2{l}", 1, D),
        ]
    entries += [("fcw", D, C), ("fcb", 1, C)]
    layout, off = {}, 0
    for name, r, c in entries:
        layout[name] = (off, r, c)
        off += ((r + 7) // 8) * 8        # keep every block 8-sublane aligned
    return layout, off


_LAYOUT, PACK_ROWS = _build_layout()


def _layer_norm(x, g, b):
    mu = jnp.mean(x, axis=-1, keepdims=True)
    var = jnp.mean((x - mu) ** 2, axis=-1, keepdims=True)
    return (x - mu) * lax.rsqrt(var + EPS) * g + b


# ---------------- Pallas kernel: full transformer forward, whole batch ----------
def transformer_kernel(x_ref, p_ref, o_ref):
    def getp(name):
        r0, nr, nc = _LAYOUT[name]
        return p_ref[r0:r0 + nr, 0:nc]

    amask = getp("amask")                                   # (BS, BS)
    # input projection; posb already folds in the input-proj bias + pos encoding
    h = jnp.dot(x_ref[...], getp("win"),
                preferred_element_type=jnp.float32) + getp("posb")       # (BS, D)

    for l in range(L):
        # fused QKV projection (Q part pre-scaled by 1/sqrt(HD) at pack time)
        qkv = jnp.dot(h, getp(f"wqkv{l}"),
                      preferred_element_type=jnp.float32) + getp(f"bqkv{l}")  # (BS, 3D)
        wo = getp(f"wo{l}")                                  # (D, D)
        attn = getp(f"bo{l}")                                # (1, D), broadcasts
        for hh in range(H):
            q = qkv[:, hh * HD:(hh + 1) * HD]                # (BS, HD)
            k = qkv[:, D + hh * HD:D + (hh + 1) * HD]
            v = qkv[:, 2 * D + hh * HD:2 * D + (hh + 1) * HD]
            s = lax.dot_general(q, k, (((1,), (1,)), ((), ())),
                                preferred_element_type=jnp.float32)       # (BS, BS)
            s = s + amask                                    # keep batches separate
            s = s - jnp.max(s, axis=-1, keepdims=True)
            e = jnp.exp(s)
            prob = e * pl.reciprocal(jnp.sum(e, axis=-1, keepdims=True),
                                     approx=True)
            ctx = jnp.dot(prob, v, preferred_element_type=jnp.float32)    # (BS, HD)
            attn = attn + jnp.dot(ctx, wo[hh * HD:(hh + 1) * HD, :],
                                  preferred_element_type=jnp.float32)

        # residual + layernorm (post-norm, PyTorch default norm_first=False)
        h = _layer_norm(h + attn, getp(f"ln1w{l}"), getp(f"ln1b{l}"))

        # feed-forward (ReLU), residual + layernorm
        ff = jnp.maximum(
            jnp.dot(h, getp(f"w1{l}"),
                    preferred_element_type=jnp.float32) + getp(f"b1{l}"), 0.0)
        ff = jnp.dot(ff, getp(f"w2{l}"),
                     preferred_element_type=jnp.float32) + getp(f"b2{l}")
        h = _layer_norm(h + ff, getp(f"ln2w{l}"), getp(f"ln2b{l}"))

    # last timestep of every batch row, then classifier (dropout = identity)
    last = jnp.concatenate(
        [h[(b + 1) * S - 1:(b + 1) * S, :] for b in range(B)], axis=0)    # (B, D)
    o_ref[...] = jnp.dot(last, getp("fcw"),
                         preferred_element_type=jnp.float32) + getp("fcb")


# ---------------- wrapper --------------------------------------------------------
def forward_pallas(x, packed):
    x2d = x.reshape(B * S, F)
    return pl.pallas_call(
        transformer_kernel,
        out_shape=jax.ShapeDtypeStruct((B, C), jnp.float32),
        grid_spec=pltpu.PrefetchScalarGridSpec(
            num_scalar_prefetch=0,
            grid=(1,),
            in_specs=[pl.BlockSpec((B * S, F), lambda i: (0, 0)),
                      pl.BlockSpec((PACK_ROWS, LANES), lambda i: (0, 0))],
            out_specs=pl.BlockSpec((B, C), lambda i: (0, 0)),
        ),
        compiler_params=pltpu.CompilerParams(
            dimension_semantics=("arbitrary",)),
    )(x2d, packed)


# ---------------- pack parameters into one lane-dense buffer ---------------------
def pack_params(p):
    def put(buf, name, arr):
        r0, nr, nc = _LAYOUT[name]
        assert arr.shape == (nr, nc), (name, arr.shape, (nr, nc))
        return buf.at[r0:r0 + nr, 0:nc].set(arr.astype(jnp.float32))

    buf = jnp.zeros((PACK_ROWS, LANES), jnp.float32)
    # positional encoding folded with input-projection bias, tiled over batch
    buf = put(buf, "posb", jnp.tile(p["pos"] + p["binp"], (B, 1)))
    # block-diagonal additive mask keeps the folded batch rows independent
    rb = jnp.arange(B * S) // S
    buf = put(buf, "amask",
              jnp.where(rb[:, None] == rb[None, :], 0.0, NEG_INF).astype(jnp.float32))
    buf = put(buf, "win", p["win"])
    for l in range(L):
        buf = put(buf, f"wqkv{l}", jnp.concatenate(
            [p["wq"][l] * SCALE, p["wk"][l], p["wv"][l]], axis=-1))
        buf = put(buf, f"bqkv{l}", jnp.concatenate(
            [p["bq"][l] * SCALE, p["bk"][l], p["bv"][l]], axis=-1))
        buf = put(buf, f"wo{l}", p["wo"][l])
        buf = put(buf, f"bo{l}", p["bo"][l])
        buf = put(buf, f"ln1w{l}", p["ln1w"][l])
        buf = put(buf, f"ln1b{l}", p["ln1b"][l])
        buf = put(buf, f"ln2w{l}", p["ln2w"][l])
        buf = put(buf, f"ln2b{l}", p["ln2b"][l])
        buf = put(buf, f"w1{l}", p["w1"][l])
        buf = put(buf, f"b1{l}", p["b1"][l])
        buf = put(buf, f"w2{l}", p["w2"][l])
        buf = put(buf, f"b2{l}", p["b2"][l])
    buf = put(buf, "fcw", p["fcw"])
    buf = put(buf, "fcb", p["fcb"])
    return buf


# ---------------- pure-JAX reference (same math, for verification) ---------------
def forward_ref(x, p):
    h = x @ p["win"] + p["binp"]
    h = h + p["pos"][None]
    for l in range(L):
        q = (h @ p["wq"][l] + p["bq"][l]).reshape(B, S, H, HD)
        k = (h @ p["wk"][l] + p["bk"][l]).reshape(B, S, H, HD)
        v = (h @ p["wv"][l] + p["bv"][l]).reshape(B, S, H, HD)
        s = jnp.einsum("bqhd,bkhd->bhqk", q, k) * SCALE
        pr = jax.nn.softmax(s, axis=-1)
        ctx = jnp.einsum("bhqk,bkhd->bqhd", pr, v).reshape(B, S, D)
        attn = ctx @ p["wo"][l] + p["bo"][l]
        h = _layer_norm(h + attn, p["ln1w"][l], p["ln1b"][l])
        ff = jnp.maximum(h @ p["w1"][l] + p["b1"][l], 0.0)
        ff = ff @ p["w2"][l] + p["b2"][l]
        h = _layer_norm(h + ff, p["ln2w"][l], p["ln2b"][l])
    return h[:, -1, :] @ p["fcw"] + p["fcb"]


# ---------------- deterministic parameter init ------------------------------------
def init_params(key):
    ks = jax.random.split(key, 16)
    scale = 0.05

    # sinusoidal positional embeddings (as copied into the learnable parameter)
    position = jnp.arange(S, dtype=jnp.float32)[:, None]
    div_term = jnp.exp(jnp.arange(0, D, 2, dtype=jnp.float32) * (-math.log(10000.0) / D))
    pe = jnp.stack([jnp.sin(position * div_term),
                    jnp.cos(position * div_term)], axis=-1).reshape(S, D)

    p = {
        "pos":  pe.astype(jnp.float32),
        "win":  scale * jax.random.normal(ks[0], (F, D), jnp.float32),
        "binp": scale * jax.random.normal(ks[1], (1, D), jnp.float32),
        # fused-per-layer attention projections (y = x @ W + b layout)
        "wq": scale * jax.random.normal(ks[2], (L, D, D), jnp.float32),
        "bq": scale * jax.random.normal(ks[3], (L, 1, D), jnp.float32),
        "wk": scale * jax.random.normal(ks[4], (L, D, D), jnp.float32),
        "bk": scale * jax.random.normal(ks[5], (L, 1, D), jnp.float32),
        "wv": scale * jax.random.normal(ks[6], (L, D, D), jnp.float32),
        "bv": scale * jax.random.normal(ks[7], (L, 1, D), jnp.float32),
        "wo": scale * jax.random.normal(ks[8], (L, D, D), jnp.float32),
        "bo": scale * jax.random.normal(ks[9], (L, 1, D), jnp.float32),
        # layer norms (PyTorch default init: weight=1, bias=0)
        "ln1w": jnp.ones((L, 1, D), jnp.float32),
        "ln1b": jnp.zeros((L, 1, D), jnp.float32),
        "ln2w": jnp.ones((L, 1, D), jnp.float32),
        "ln2b": jnp.zeros((L, 1, D), jnp.float32),
        # feed-forward
        "w1": scale * jax.random.normal(ks[10], (L, D, FF), jnp.float32),
        "b1": jnp.zeros((L, 1, FF), jnp.float32),
        "w2": scale * jax.random.normal(ks[11], (L, FF, D), jnp.float32),
        "b2": jnp.zeros((L, 1, D), jnp.float32),
        # final classifier
        "fcw": scale * jax.random.normal(ks[12], (D, C), jnp.float32),
        "fcb": jnp.zeros((1, C), jnp.float32),
    }
    return p


if __name__ == "__main__":
    key = jax.random.PRNGKey(0)
    params = init_params(key)
    packed = pack_params(params)
    x = jax.random.normal(jax.random.fold_in(key, 1), (B, S, F), jnp.float32)

    out = jax.block_until_ready(forward_pallas(x, packed))
    ref = forward_ref(x, params)

    assert out.shape == (B, C)
    # slightly relaxed tolerance because softmax uses pl.reciprocal(approx=True)
    assert jnp.allclose(out, ref, rtol=5e-3, atol=5e-3), (out, ref)

    print("KERNEL_OK")
</pallas_src>

<mosaic_0001>
module attributes {stable_mosaic.version = 11 : i64} {
  func.func @transformer_kernel(%arg0: i32, %arg1: memref<16x16xf32, #tpu.memory_space<vmem>>, %arg2: memref<536x128xf32, #tpu.memory_space<vmem>>, %arg3: memref<2x8xf32, #tpu.memory_space<vmem>>) attributes {dimension_semantics = [#tpu.dimension_semantics<arbitrary>], iteration_bounds = array<i64: 1>, scalar_prefetch = 0 : i64, scratch_operands = 0 : i64, tpu.core_type = #tpu.core_type<tc>, window_params = [{pipeline_mode = #tpu.pipeline_mode<synchronous>, transform_indices = @transform_0, window_bounds = array<i64: 16, 16>}, {pipeline_mode = #tpu.pipeline_mode<synchronous>, transform_indices = @transform_1, window_bounds = array<i64: 536, 128>}, {pipeline_mode = #tpu.pipeline_mode<synchronous>, transform_indices = @transform_2, window_bounds = array<i64: 2, 8>}]} {
    %c16 = arith.constant 16 : index
    %c0 = arith.constant 0 : index
    %0 = vector.load %arg2[%c16, %c0] : memref<536x128xf32, #tpu.memory_space<vmem>>, vector<16x16xf32>
    %c0_0 = arith.constant 0 : index
    %c0_1 = arith.constant 0 : index
    %1 = vector.load %arg1[%c0_0, %c0_1] : memref<16x16xf32, #tpu.memory_space<vmem>>, vector<16x16xf32>
    %c32 = arith.constant 32 : index
    %c0_2 = arith.constant 0 : index
    %2 = vector.load %arg2[%c32, %c0_2] : memref<536x128xf32, #tpu.memory_space<vmem>>, vector<16x32xf32>
    %cst = arith.constant dense<0.000000e+00> : vector<16x32xf32>
    %3 = tpu.matmul %1, %2, %cst {dimension_numbers = #tpu.dot_dimension_numbers<[1], [0], [0], [1], [0, 0, 1, 1], [], []>} : vector<16x16xf32>, vector<16x32xf32>, vector<16x32xf32> -> vector<16x32xf32>
    %c0_3 = arith.constant 0 : index
    %c0_4 = arith.constant 0 : index
    %4 = vector.load %arg2[%c0_3, %c0_4] : memref<536x128xf32, #tpu.memory_space<vmem>>, vector<16x32xf32>
    %5 = arith.addf %3, %4 : vector<16x32xf32>
    %c48 = arith.constant 48 : index
    %c0_5 = arith.constant 0 : index
    %6 = vector.load %arg2[%c48, %c0_5] : memref<536x128xf32, #tpu.memory_space<vmem>>, vector<32x96xf32>
    %cst_6 = arith.constant dense<0.000000e+00> : vector<16x96xf32>
    %7 = tpu.matmul %5, %6, %cst_6 {dimension_numbers = #tpu.dot_dimension_numbers<[1], [0], [0], [1], [0, 0, 1, 1], [], []>} : vector<16x32xf32>, vector<32x96xf32>, vector<16x96xf32> -> vector<16x96xf32>
    %c80 = arith.constant 80 : index
    %c0_7 = arith.constant 0 : index
    %8 = vector.load %arg2[%c80, %c0_7] : memref<536x128xf32, #tpu.memory_space<vmem>>, vector<1x96xf32>
    %9 = vector.broadcast %8 : vector<1x96xf32> to vector<16x96xf32>
    %10 = arith.addf %7, %9 : vector<16x96xf32>
    %c88 = arith.constant 88 : index
    %c0_8 = arith.constant 0 : index
    %11 = vector.load %arg2[%c88, %c0_8] : memref<536x128xf32, #tpu.memory_space<vmem>>, vector<32x32xf32>
    %c120 = arith.constant 120 : index
    %c0_9 = arith.constant 0 : index
    %12 = vector.load %arg2[%c120, %c0_9] : memref<536x128xf32, #tpu.memory_space<vmem>>, vector<1x32xf32>
    %13 = vector.extract_strided_slice %10 {offsets = [0, 0], sizes = [16, 8], strides = [1, 1]} : vector<16x96xf32> to vector<16x8xf32>
    %14 = vector.extract_strided_slice %10 {offsets = [0, 32], sizes = [16, 8], strides = [1, 1]} : vector<16x96xf32> to vector<16x8xf32>
    %15 = vector.extract_strided_slice %10 {offsets = [0, 64], sizes = [16, 8], strides = [1, 1]} : vector<16x96xf32> to vector<16x8xf32>
    %cst_10 = arith.constant dense<0.000000e+00> : vector<16x16xf32>
    %16 = tpu.matmul %13, %14, %cst_10 {dimension_numbers = #tpu.dot_dimension_numbers<[1], [1], [0], [0], [0, 0, 1, 0], [], []>} : vector<16x8xf32>, vector<16x8xf32>, vector<16x16xf32> -> vector<16x16xf32>
    %17 = arith.addf %16, %0 : vector<16x16xf32>
    %cst_11 = arith.constant dense<0xFF800000> : vector<16xf32>
    %18 = vector.multi_reduction <maximumf>, %17, %cst_11 [1] : vector<16x16xf32> to vector<16xf32>
    %19 = vector.shape_cast %18 : vector<16xf32> to vector<16x1xf32>
    %20 = vector.broadcast %19 : vector<16x1xf32> to vector<16x16xf32>
    %21 = arith.subf %17, %20 : vector<16x16xf32>
    %22 = math.exp %21 : vector<16x16xf32>
    %cst_12 = arith.constant dense<0.000000e+00> : vector<16xf32>
    %23 = vector.multi_reduction <add>, %22, %cst_12 [1] : vector<16x16xf32> to vector<16xf32>
    %24 = vector.shape_cast %23 : vector<16xf32> to vector<16x1xf32>
    %25 = tpu.reciprocal %24 {approx = true} : vector<16x1xf32> -> vector<16x1xf32>
    %26 = vector.broadcast %25 : vector<16x1xf32> to vector<16x16xf32>
    %27 = arith.mulf %22, %26 : vector<16x16xf32>
    %cst_13 = arith.constant dense<0.000000e+00> : vector<16x8xf32>
    %28 = tpu.matmul %27, %15, %cst_13 {dimension_numbers = #tpu.dot_dimension_numbers<[1], [0], [0], [1], [0, 0, 1, 1], [], []>} : vector<16x16xf32>, vector<16x8xf32>, vector<16x8xf32> -> vector<16x8xf32>
    %29 = vector.extract_strided_slice %11 {offsets = [0, 0], sizes = [8, 32], strides = [1, 1]} : vector<32x32xf32> to vector<8x32xf32>
    %cst_14 = arith.constant dense<0.000000e+00> : vector<16x32xf32>
    %30 = tpu.matmul %28, %29, %cst_14 {dimension_numbers = #tpu.dot_dimension_numbers<[1], [0], [0], [1], [0, 0, 1, 1], [], []>} : vector<16x8xf32>, vector<8x32xf32>, vector<16x32xf32> -> vector<16x32xf32>
    %31 = vector.broadcast %12 : vector<1x32xf32> to vector<16x32xf32>
    %32 = arith.addf %31, %30 : vector<16x32xf32>
    %33 = vector.extract_strided_slice %10 {offsets = [0, 8], sizes = [16, 8], strides = [1, 1]} : vector<16x96xf32> to vector<16x8xf32>
    %34 = vector.extract_strided_slice %10 {offsets = [0, 40], sizes = [16, 8], strides = [1, 1]} : vector<16x96xf32> to vector<16x8xf32>
    %35 = vector.extract_strided_slice %10 {offsets = [0, 72], sizes = [16, 8], strides = [1, 1]} : vector<16x96xf32> to vector<16x8xf32>
    %cst_15 = arith.constant dense<0.000000e+00> : vector<16x16xf32>
    %36 = tpu.matmul %33, %34, %cst_15 {dimension_numbers = #tpu.dot_dimension_numbers<[1], [1], [0], [0], [0, 0, 1, 0], [], []>} : vector<16x8xf32>, vector<16x8xf32>, vector<16x16xf32> -> vector<16x16xf32>
    %37 = arith.addf %36, %0 : vector<16x16xf32>
    %cst_16 = arith.constant dense<0xFF800000> : vector<16xf32>
    %38 = vector.multi_reduction <maximumf>, %37, %cst_16 [1] : vector<16x16xf32> to vector<16xf32>
    %39 = vector.shape_cast %38 : vector<16xf32> to vector<16x1xf32>
    %40 = vector.broadcast %39 : vector<16x1xf32> to vector<16x16xf32>
    %41 = arith.subf %37, %40 : vector<16x16xf32>
    %42 = math.exp %41 : vector<16x16xf32>
    %cst_17 = arith.constant dense<0.000000e+00> : vector<16xf32>
    %43 = vector.multi_reduction <add>, %42, %cst_17 [1] : vector<16x16xf32> to vector<16xf32>
    %44 = vector.shape_cast %43 : vector<16xf32> to vector<16x1xf32>
    %45 = tpu.reciprocal %44 {approx = true} : vector<16x1xf32> -> vector<16x1xf32>
    %46 = vector.broadcast %45 : vector<16x1xf32> to vector<16x16xf32>
    %47 = arith.mulf %42, %46 : vector<16x16xf32>
    %cst_18 = arith.constant dense<0.000000e+00> : vector<16x8xf32>
    %48 = tpu.matmul %47, %35, %cst_18 {dimension_numbers = #tpu.dot_dimension_numbers<[1], [0], [0], [1], [0, 0, 1, 1], [], []>} : vector<16x16xf32>, vector<16x8xf32>, vector<16x8xf32> -> vector<16x8xf32>
    %49 = vector.extract_strided_slice %11 {offsets = [8, 0], sizes = [8, 32], strides = [1, 1]} : vector<32x32xf32> to vector<8x32xf32>
    %cst_19 = arith.constant dense<0.000000e+00> : vector<16x32xf32>
    %50 = tpu.matmul %48, %49, %cst_19 {dimension_numbers = #tpu.dot_dimension_numbers<[1], [0], [0], [1], [0, 0, 1, 1], [], []>} : vector<16x8xf32>, vector<8x32xf32>, vector<16x32xf32> -> vector<16x32xf32>
    %51 = arith.addf %32, %50 : vector<16x32xf32>
    %52 = vector.extract_strided_slice %10 {offsets = [0, 16], sizes = [16, 8], strides = [1, 1]} : vector<16x96xf32> to vector<16x8xf32>
    %53 = vector.extract_strided_slice %10 {offsets = [0, 48], sizes = [16, 8], strides = [1, 1]} : vector<16x96xf32> to vector<16x8xf32>
    %54 = vector.extract_strided_slice %10 {offsets = [0, 80], sizes = [16, 8], strides = [1, 1]} : vector<16x96xf32> to vector<16x8xf32>
    %cst_20 = arith.constant dense<0.000000e+00> : vector<16x16xf32>
    %55 = tpu.matmul %52, %53, %cst_20 {dimension_numbers = #tpu.dot_dimension_numbers<[1], [1], [0], [0], [0, 0, 1, 0], [], []>} : vector<16x8xf32>, vector<16x8xf32>, vector<16x16xf32> -> vector<16x16xf32>
    %56 = arith.addf %55, %0 : vector<16x16xf32>
    %cst_21 = arith.constant dense<0xFF800000> : vector<16xf32>
    %57 = vector.multi_reduction <maximumf>, %56, %cst_21 [1] : vector<16x16xf32> to vector<16xf32>
    %58 = vector.shape_cast %57 : vector<16xf32> to vector<16x1xf32>
    %59 = vector.broadcast %58 : vector<16x1xf32> to vector<16x16xf32>
    %60 = arith.subf %56, %59 : vector<16x16xf32>
    %61 = math.exp %60 : vector<16x16xf32>
    %cst_22 = arith.constant dense<0.000000e+00> : vector<16xf32>
    %62 = vector.multi_reduction <add>, %61, %cst_22 [1] : vector<16x16xf32> to vector<16xf32>
    %63 = vector.shape_cast %62 : vector<16xf32> to vector<16x1xf32>
    %64 = tpu.reciprocal %63 {approx = true} : vector<16x1xf32> -> vector<16x1xf32>
    %65 = vector.broadcast %64 : vector<16x1xf32> to vector<16x16xf32>
    %66 = arith.mulf %61, %65 : vector<16x16xf32>
    %cst_23 = arith.constant dense<0.000000e+00> : vector<16x8xf32>
    %67 = tpu.matmul %66, %54, %cst_23 {dimension_numbers = #tpu.dot_dimension_numbers<[1], [0], [0], [1], [0, 0, 1, 1], [], []>} : vector<16x16xf32>, vector<16x8xf32>, vector<16x8xf32> -> vector<16x8xf32>
    %68 = vector.extract_strided_slice %11 {offsets = [16, 0], sizes = [8, 32], strides = [1, 1]} : vector<32x32xf32> to vector<8x32xf32>
    %cst_24 = arith.constant dense<0.000000e+00> : vector<16x32xf32>
    %69 = tpu.matmul %67, %68, %cst_24 {dimension_numbers = #tpu.dot_dimension_numbers<[1], [0], [0], [1], [0, 0, 1, 1], [], []>} : vector<16x8xf32>, vector<8x32xf32>, vector<16x32xf32> -> vector<16x32xf32>
    %70 = arith.addf %51, %69 : vector<16x32xf32>
    %71 = vector.extract_strided_slice %10 {offsets = [0, 24], sizes = [16, 8], strides = [1, 1]} : vector<16x96xf32> to vector<16x8xf32>
    %72 = vector.extract_strided_slice %10 {offsets = [0, 56], sizes = [16, 8], strides = [1, 1]} : vector<16x96xf32> to vector<16x8xf32>
    %73 = vector.extract_strided_slice %10 {offsets = [0, 88], sizes = [16, 8], strides = [1, 1]} : vector<16x96xf32> to vector<16x8xf32>
    %cst_25 = arith.constant dense<0.000000e+00> : vector<16x16xf32>
    %74 = tpu.matmul %71, %72, %cst_25 {dimension_numbers = #tpu.dot_dimension_numbers<[1], [1], [0], [0], [0, 0, 1, 0], [], []>} : vector<16x8xf32>, vector<16x8xf32>, vector<16x16xf32> -> vector<16x16xf32>
    %75 = arith.addf %74, %0 : vector<16x16xf32>
    %cst_26 = arith.constant dense<0xFF800000> : vector<16xf32>
    %76 = vector.multi_reduction <maximumf>, %75, %cst_26 [1] : vector<16x16xf32> to vector<16xf32>
    %77 = vector.shape_cast %76 : vector<16xf32> to vector<16x1xf32>
    %78 = vector.broadcast %77 : vector<16x1xf32> to vector<16x16xf32>
    %79 = arith.subf %75, %78 : vector<16x16xf32>
    %80 = math.exp %79 : vector<16x16xf32>
    %cst_27 = arith.constant dense<0.000000e+00> : vector<16xf32>
    %81 = vector.multi_reduction <add>, %80, %cst_27 [1] : vector<16x16xf32> to vector<16xf32>
    %82 = vector.shape_cast %81 : vector<16xf32> to vector<16x1xf32>
    %83 = tpu.reciprocal %82 {approx = true} : vector<16x1xf32> -> vector<16x1xf32>
    %84 = vector.broadcast %83 : vector<16x1xf32> to vector<16x16xf32>
    %85 = arith.mulf %80, %84 : vector<16x16xf32>
    %cst_28 = arith.constant dense<0.000000e+00> : vector<16x8xf32>
    %86 = tpu.matmul %85, %73, %cst_28 {dimension_numbers = #tpu.dot_dimension_numbers<[1], [0], [0], [1], [0, 0, 1, 1], [], []>} : vector<16x16xf32>, vector<16x8xf32>, vector<16x8xf32> -> vector<16x8xf32>
    %87 = vector.extract_strided_slice %11 {offsets = [24, 0], sizes = [8, 32], strides = [1, 1]} : vector<32x32xf32> to vector<8x32xf32>
    %cst_29 = arith.constant dense<0.000000e+00> : vector<16x32xf32>
    %88 = tpu.matmul %86, %87, %cst_29 {dimension_numbers = #tpu.dot_dimension_numbers<[1], [0], [0], [1], [0, 0, 1, 1], [], []>} : vector<16x8xf32>, vector<8x32xf32>, vector<16x32xf32> -> vector<16x32xf32>
    %89 = arith.addf %70, %88 : vector<16x32xf32>
    %90 = arith.addf %5, %89 : vector<16x32xf32>
    %c128 = arith.constant 128 : index
    %c0_30 = arith.constant 0 : index
    %91 = vector.load %arg2[%c128, %c0_30] : memref<536x128xf32, #tpu.memory_space<vmem>>, vector<1x32xf32>
    %c136 = arith.constant 136 : index
    %c0_31 = arith.constant 0 : index
    %92 = vector.load %arg2[%c136, %c0_31] : memref<536x128xf32, #tpu.memory_space<vmem>>, vector<1x32xf32>
    %cst_32 = arith.constant dense<0.000000e+00> : vector<16xf32>
    %93 = vector.multi_reduction <add>, %90, %cst_32 [1] : vector<16x32xf32> to vector<16xf32>
    %94 = vector.shape_cast %93 : vector<16xf32> to vector<16x1xf32>
    %cst_33 = arith.constant 3.200000e+01 : f32
    %95 = vector.broadcast %cst_33 : f32 to vector<16x1xf32>
    %96 = arith.divf %94, %95 : vector<16x1xf32>
    %97 = vector.broadcast %96 : vector<16x1xf32> to vector<16x32xf32>
    %98 = arith.subf %90, %97 : vector<16x32xf32>
    %99 = arith.mulf %98, %98 : vector<16x32xf32>
    %cst_34 = arith.constant dense<0.000000e+00> : vector<16xf32>
    %100 = vector.multi_reduction <add>, %99, %cst_34 [1] : vector<16x32xf32> to vector<16xf32>
    %101 = vector.shape_cast %100 : vector<16xf32> to vector<16x1xf32>
    %cst_35 = arith.constant 3.200000e+01 : f32
    %102 = vector.broadcast %cst_35 : f32 to vector<16x1xf32>
    %103 = arith.divf %101, %102 : vector<16x1xf32>
    %104 = vector.broadcast %96 : vector<16x1xf32> to vector<16x32xf32>
    %105 = arith.subf %90, %104 : vector<16x32xf32>
    %cst_36 = arith.constant 9.99999974E-6 : f32
    %106 = vector.broadcast %cst_36 : f32 to vector<16x1xf32>
    %107 = arith.addf %103, %106 : vector<16x1xf32>
    %108 = math.rsqrt %107 : vector<16x1xf32>
    %109 = vector.broadcast %108 : vector<16x1xf32> to vector<16x32xf32>
    %110 = arith.mulf %105, %109 : vector<16x32xf32>
    %111 = vector.broadcast %91 : vector<1x32xf32> to vector<16x32xf32>
    %112 = arith.mulf %110, %111 : vector<16x32xf32>
    %113 = vector.broadcast %92 : vector<1x32xf32> to vector<16x32xf32>
    %114 = arith.addf %112, %113 : vector<16x32xf32>
    %c160 = arith.constant 160 : index
    %c0_37 = arith.constant 0 : index
    %115 = vector.load %arg2[%c160, %c0_37] : memref<536x128xf32, #tpu.memory_space<vmem>>, vector<32x64xf32>
    %cst_38 = arith.constant dense<0.000000e+00> : vector<16x64xf32>
    %116 = tpu.matmul %114, %115, %cst_38 {dimension_numbers = #tpu.dot_dimension_numbers<[1], [0], [0], [1], [0, 0, 1, 1], [], []>} : vector<16x32xf32>, vector<32x64xf32>, vector<16x64xf32> -> vector<16x64xf32>
    %c192 = arith.constant 192 : index
    %c0_39 = arith.constant 0 : index
    %117 = vector.load %arg2[%c192, %c0_39] : memref<536x128xf32, #tpu.memory_space<vmem>>, vector<1x64xf32>
    %118 = vector.broadcast %117 : vector<1x64xf32> to vector<16x64xf32>
    %119 = arith.addf %116, %118 : vector<16x64xf32>
    %cst_40 = arith.constant 0.000000e+00 : f32
    %120 = vector.broadcast %cst_40 : f32 to vector<16x64xf32>
    %121 = arith.maximumf %119, %120 : vector<16x64xf32>
    %c200 = arith.constant 200 : index
    %c0_41 = arith.constant 0 : index
    %122 = vector.load %arg2[%c200, %c0_41] : memref<536x128xf32, #tpu.memory_space<vmem>>, vector<64x32xf32>
    %cst_42 = arith.constant dense<0.000000e+00> : vector<16x32xf32>
    %123 = tpu.matmul %121, %122, %cst_42 {dimension_numbers = #tpu.dot_dimension_numbers<[1], [0], [0], [1], [0, 0, 1, 1], [], []>} : vector<16x64xf32>, vector<64x32xf32>, vector<16x32xf32> -> vector<16x32xf32>
    %c264 = arith.constant 264 : index
    %c0_43 = arith.constant 0 : index
    %124 = vector.load %arg2[%c264, %c0_43] : memref<536x128xf32, #tpu.memory_space<vmem>>, vector<1x32xf32>
    %125 = vector.broadcast %124 : vector<1x32xf32> to vector<16x32xf32>
    %126 = arith.addf %123, %125 : vector<16x32xf32>
    %127 = arith.addf %114, %126 : vector<16x32xf32>
    %c144 = arith.constant 144 : index
    %c0_44 = arith.constant 0 : index
    %128 = vector.load %arg2[%c144, %c0_44] : memref<536x128xf32, #tpu.memory_space<vmem>>, vector<1x32xf32>
    %c152 = arith.constant 152 : index
    %c0_45 = arith.constant 0 : index
    %129 = vector.load %arg2[%c152, %c0_45] : memref<536x128xf32, #tpu.memory_space<vmem>>, vector<1x32xf32>
    %cst_46 = arith.constant dense<0.000000e+00> : vector<16xf32>
    %130 = vector.multi_reduction <add>, %127, %cst_46 [1] : vector<16x32xf32> to vector<16xf32>
    %131 = vector.shape_cast %130 : vector<16xf32> to vector<16x1xf32>
    %cst_47 = arith.constant 3.200000e+01 : f32
    %132 = vector.broadcast %cst_47 : f32 to vector<16x1xf32>
    %133 = arith.divf %131, %132 : vector<16x1xf32>
    %134 = vector.broadcast %133 : vector<16x1xf32> to vector<16x32xf32>
    %135 = arith.subf %127, %134 : vector<16x32xf32>
    %136 = arith.mulf %135, %135 : vector<16x32xf32>
    %cst_48 = arith.constant dense<0.000000e+00> : vector<16xf32>
    %137 = vector.multi_reduction <add>, %136, %cst_48 [1] : vector<16x32xf32> to vector<16xf32>
    %138 = vector.shape_cast %137 : vector<16xf32> to vector<16x1xf32>
    %cst_49 = arith.constant 3.200000e+01 : f32
    %139 = vector.broadcast %cst_49 : f32 to vector<16x1xf32>
    %140 = arith.divf %138, %139 : vector<16x1xf32>
    %141 = vector.broadcast %133 : vector<16x1xf32> to vector<16x32xf32>
    %142 = arith.subf %127, %141 : vector<16x32xf32>
    %cst_50 = arith.constant 9.99999974E-6 : f32
    %143 = vector.broadcast %cst_50 : f32 to vector<16x1xf32>
    %144 = arith.addf %140, %143 : vector<16x1xf32>
    %145 = math.rsqrt %144 : vector<16x1xf32>
    %146 = vector.broadcast %145 : vector<16x1xf32> to vector<16x32xf32>
    %147 = arith.mulf %142, %146 : vector<16x32xf32>
    %148 = vector.broadcast %128 : vector<1x32xf32> to vector<16x32xf32>
    %149 = arith.mulf %147, %148 : vector<16x32xf32>
    %150 = vector.broadcast %129 : vector<1x32xf32> to vector<16x32xf32>
    %151 = arith.addf %149, %150 : vector<16x32xf32>
    %c272 = arith.constant 272 : index
    %c0_51 = arith.constant 0 : index
    %152 = vector.load %arg2[%c272, %c0_51] : memref<536x128xf32, #tpu.memory_space<vmem>>, vector<32x96xf32>
    %cst_52 = arith.constant dense<0.000000e+00> : vector<16x96xf32>
    %153 = tpu.matmul %151, %152, %cst_52 {dimension_numbers = #tpu.dot_dimension_numbers<[1], [0], [0], [1], [0, 0, 1, 1], [], []>} : vector<16x32xf32>, vector<32x96xf32>, vector<16x96xf32> -> vector<16x96xf32>
    %c304 = arith.constant 304 : index
    %c0_53 = arith.constant 0 : index
    %154 = vector.load %arg2[%c304, %c0_53] : memref<536x128xf32, #tpu.memory_space<vmem>>, vector<1x96xf32>
    %155 = vector.broadcast %154 : vector<1x96xf32> to vector<16x96xf32>
    %156 = arith.addf %153, %155 : vector<16x96xf32>
    %c312 = arith.constant 312 : index
    %c0_54 = arith.constant 0 : index
    %157 = vector.load %arg2[%c312, %c0_54] : memref<536x128xf32, #tpu.memory_space<vmem>>, vector<32x32xf32>
    %c344 = arith.constant 344 : index
    %c0_55 = arith.constant 0 : index
    %158 = vector.load %arg2[%c344, %c0_55] : memref<536x128xf32, #tpu.memory_space<vmem>>, vector<1x32xf32>
    %159 = vector.extract_strided_slice %156 {offsets = [0, 0], sizes = [16, 8], strides = [1, 1]} : vector<16x96xf32> to vector<16x8xf32>
    %160 = vector.extract_strided_slice %156 {offsets = [0, 32], sizes = [16, 8], strides = [1, 1]} : vector<16x96xf32> to vector<16x8xf32>
    %161 = vector.extract_strided_slice %156 {offsets = [0, 64], sizes = [16, 8], strides = [1, 1]} : vector<16x96xf32> to vector<16x8xf32>
    %cst_56 = arith.constant dense<0.000000e+00> : vector<16x16xf32>
    %162 = tpu.matmul %159, %160, %cst_56 {dimension_numbers = #tpu.dot_dimension_numbers<[1], [1], [0], [0], [0, 0, 1, 0], [], []>} : vector<16x8xf32>, vector<16x8xf32>, vector<16x16xf32> -> vector<16x16xf32>
    %163 = arith.addf %162, %0 : vector<16x16xf32>
    %cst_57 = arith.constant dense<0xFF800000> : vector<16xf32>
    %164 = vector.multi_reduction <maximumf>, %163, %cst_57 [1] : vector<16x16xf32> to vector<16xf32>
    %165 = vector.shape_cast %164 : vector<16xf32> to vector<16x1xf32>
    %166 = vector.broadcast %165 : vector<16x1xf32> to vector<16x16xf32>
    %167 = arith.subf %163, %166 : vector<16x16xf32>
    %168 = math.exp %167 : vector<16x16xf32>
    %cst_58 = arith.constant dense<0.000000e+00> : vector<16xf32>
    %169 = vector.multi_reduction <add>, %168, %cst_58 [1] : vector<16x16xf32> to vector<16xf32>
    %170 = vector.shape_cast %169 : vector<16xf32> to vector<16x1xf32>
    %171 = tpu.reciprocal %170 {approx = true} : vector<16x1xf32> -> vector<16x1xf32>
    %172 = vector.broadcast %171 : vector<16x1xf32> to vector<16x16xf32>
    %173 = arith.mulf %168, %172 : vector<16x16xf32>
    %cst_59 = arith.constant dense<0.000000e+00> : vector<16x8xf32>
    %174 = tpu.matmul %173, %161, %cst_59 {dimension_numbers = #tpu.dot_dimension_numbers<[1], [0], [0], [1], [0, 0, 1, 1], [], []>} : vector<16x16xf32>, vector<16x8xf32>, vector<16x8xf32> -> vector<16x8xf32>
    %175 = vector.extract_strided_slice %157 {offsets = [0, 0], sizes = [8, 32], strides = [1, 1]} : vector<32x32xf32> to vector<8x32xf32>
    %cst_60 = arith.constant dense<0.000000e+00> : vector<16x32xf32>
    %176 = tpu.matmul %174, %175, %cst_60 {dimension_numbers = #tpu.dot_dimension_numbers<[1], [0], [0], [1], [0, 0, 1, 1], [], []>} : vector<16x8xf32>, vector<8x32xf32>, vector<16x32xf32> -> vector<16x32xf32>
    %177 = vector.broadcast %158 : vector<1x32xf32> to vector<16x32xf32>
    %178 = arith.addf %177, %176 : vector<16x32xf32>
    %179 = vector.extract_strided_slice %156 {offsets = [0, 8], sizes = [16, 8], strides = [1, 1]} : vector<16x96xf32> to vector<16x8xf32>
    %180 = vector.extract_strided_slice %156 {offsets = [0, 40], sizes = [16, 8], strides = [1, 1]} : vector<16x96xf32> to vector<16x8xf32>
    %181 = vector.extract_strided_slice %156 {offsets = [0, 72], sizes = [16, 8], strides = [1, 1]} : vector<16x96xf32> to vector<16x8xf32>
    %cst_61 = arith.constant dense<0.000000e+00> : vector<16x16xf32>
    %182 = tpu.matmul %179, %180, %cst_61 {dimension_numbers = #tpu.dot_dimension_numbers<[1], [1], [0], [0], [0, 0, 1, 0], [], []>} : vector<16x8xf32>, vector<16x8xf32>, vector<16x16xf32> -> vector<16x16xf32>
    %183 = arith.addf %182, %0 : vector<16x16xf32>
    %cst_62 = arith.constant dense<0xFF800000> : vector<16xf32>
    %184 = vector.multi_reduction <maximumf>, %183, %cst_62 [1] : vector<16x16xf32> to vector<16xf32>
    %185 = vector.shape_cast %184 : vector<16xf32> to vector<16x1xf32>
    %186 = vector.broadcast %185 : vector<16x1xf32> to vector<16x16xf32>
    %187 = arith.subf %183, %186 : vector<16x16xf32>
    %188 = math.exp %187 : vector<16x16xf32>
    %cst_63 = arith.constant dense<0.000000e+00> : vector<16xf32>
    %189 = vector.multi_reduction <add>, %188, %cst_63 [1] : vector<16x16xf32> to vector<16xf32>
    %190 = vector.shape_cast %189 : vector<16xf32> to vector<16x1xf32>
    %191 = tpu.reciprocal %190 {approx = true} : vector<16x1xf32> -> vector<16x1xf32>
    %192 = vector.broadcast %191 : vector<16x1xf32> to vector<16x16xf32>
    %193 = arith.mulf %188, %192 : vector<16x16xf32>
    %cst_64 = arith.constant dense<0.000000e+00> : vector<16x8xf32>
    %194 = tpu.matmul %193, %181, %cst_64 {dimension_numbers = #tpu.dot_dimension_numbers<[1], [0], [0], [1], [0, 0, 1, 1], [], []>} : vector<16x16xf32>, vector<16x8xf32>, vector<16x8xf32> -> vector<16x8xf32>
    %195 = vector.extract_strided_slice %157 {offsets = [8, 0], sizes = [8, 32], strides = [1, 1]} : vector<32x32xf32> to vector<8x32xf32>
    %cst_65 = arith.constant dense<0.000000e+00> : vector<16x32xf32>
    %196 = tpu.matmul %194, %195, %cst_65 {dimension_numbers = #tpu.dot_dimension_numbers<[1], [0], [0], [1], [0, 0, 1, 1], [], []>} : vector<16x8xf32>, vector<8x32xf32>, vector<16x32xf32> -> vector<16x32xf32>
    %197 = arith.addf %178, %196 : vector<16x32xf32>
    %198 = vector.extract_strided_slice %156 {offsets = [0, 16], sizes = [16, 8], strides = [1, 1]} : vector<16x96xf32> to vector<16x8xf32>
    %199 = vector.extract_strided_slice %156 {offsets = [0, 48], sizes = [16, 8], strides = [1, 1]} : vector<16x96xf32> to vector<16x8xf32>
    %200 = vector.extract_strided_slice %156 {offsets = [0, 80], sizes = [16, 8], strides = [1, 1]} : vector<16x96xf32> to vector<16x8xf32>
    %cst_66 = arith.constant dense<0.000000e+00> : vector<16x16xf32>
    %201 = tpu.matmul %198, %199, %cst_66 {dimension_numbers = #tpu.dot_dimension_numbers<[1], [1], [0], [0], [0, 0, 1, 0], [], []>} : vector<16x8xf32>, vector<16x8xf32>, vector<16x16xf32> -> vector<16x16xf32>
    %202 = arith.addf %201, %0 : vector<16x16xf32>
    %cst_67 = arith.constant dense<0xFF800000> : vector<16xf32>
    %203 = vector.multi_reduction <maximumf>, %202, %cst_67 [1] : vector<16x16xf32> to vector<16xf32>
    %204 = vector.shape_cast %203 : vector<16xf32> to vector<16x1xf32>
    %205 = vector.broadcast %204 : vector<16x1xf32> to vector<16x16xf32>
    %206 = arith.subf %202, %205 : vector<16x16xf32>
    %207 = math.exp %206 : vector<16x16xf32>
    %cst_68 = arith.constant dense<0.000000e+00> : vector<16xf32>
    %208 = vector.multi_reduction <add>, %207, %cst_68 [1] : vector<16x16xf32> to vector<16xf32>
    %209 = vector.shape_cast %208 : vector<16xf32> to vector<16x1xf32>
    %210 = tpu.reciprocal %209 {approx = true} : vector<16x1xf32> -> vector<16x1xf32>
    %211 = vector.broadcast %210 : vector<16x1xf32> to vector<16x16xf32>
    %212 = arith.mulf %207, %211 : vector<16x16xf32>
    %cst_69 = arith.constant dense<0.000000e+00> : vector<16x8xf32>
    %213 = tpu.matmul %212, %200, %cst_69 {dimension_numbers = #tpu.dot_dimension_numbers<[1], [0], [0], [1], [0, 0, 1, 1], [], []>} : vector<16x16xf32>, vector<16x8xf32>, vector<16x8xf32> -> vector<16x8xf32>
    %214 = vector.extract_strided_slice %157 {offsets = [16, 0], sizes = [8, 32], strides = [1, 1]} : vector<32x32xf32> to vector<8x32xf32>
    %cst_70 = arith.constant dense<0.000000e+00> : vector<16x32xf32>
    %215 = tpu.matmul %213, %214, %cst_70 {dimension_numbers = #tpu.dot_dimension_numbers<[1], [0], [0], [1], [0, 0, 1, 1], [], []>} : vector<16x8xf32>, vector<8x32xf32>, vector<16x32xf32> -> vector<16x32xf32>
    %216 = arith.addf %197, %215 : vector<16x32xf32>
    %217 = vector.extract_strided_slice %156 {offsets = [0, 24], sizes = [16, 8], strides = [1, 1]} : vector<16x96xf32> to vector<16x8xf32>
    %218 = vector.extract_strided_slice %156 {offsets = [0, 56], sizes = [16, 8], strides = [1, 1]} : vector<16x96xf32> to vector<16x8xf32>
    %219 = vector.extract_strided_slice %156 {offsets = [0, 88], sizes = [16, 8], strides = [1, 1]} : vector<16x96xf32> to vector<16x8xf32>
    %cst_71 = arith.constant dense<0.000000e+00> : vector<16x16xf32>
    %220 = tpu.matmul %217, %218, %cst_71 {dimension_numbers = #tpu.dot_dimension_numbers<[1], [1], [0], [0], [0, 0, 1, 0], [], []>} : vector<16x8xf32>, vector<16x8xf32>, vector<16x16xf32> -> vector<16x16xf32>
    %221 = arith.addf %220, %0 : vector<16x16xf32>
    %cst_72 = arith.constant dense<0xFF800000> : vector<16xf32>
    %222 = vector.multi_reduction <maximumf>, %221, %cst_72 [1] : vector<16x16xf32> to vector<16xf32>
    %223 = vector.shape_cast %222 : vector<16xf32> to vector<16x1xf32>
    %224 = vector.broadcast %223 : vector<16x1xf32> to vector<16x16xf32>
    %225 = arith.subf %221, %224 : vector<16x16xf32>
    %226 = math.exp %225 : vector<16x16xf32>
    %cst_73 = arith.constant dense<0.000000e+00> : vector<16xf32>
    %227 = vector.multi_reduction <add>, %226, %cst_73 [1] : vector<16x16xf32> to vector<16xf32>
    %228 = vector.shape_cast %227 : vector<16xf32> to vector<16x1xf32>
    %229 = tpu.reciprocal %228 {approx = true} : vector<16x1xf32> -> vector<16x1xf32>
    %230 = vector.broadcast %229 : vector<16x1xf32> to vector<16x16xf32>
    %231 = arith.mulf %226, %230 : vector<16x16xf32>
    %cst_74 = arith.constant dense<0.000000e+00> : vector<16x8xf32>
    %232 = tpu.matmul %231, %219, %cst_74 {dimension_numbers = #tpu.dot_dimension_numbers<[1], [0], [0], [1], [0, 0, 1, 1], [], []>} : vector<16x16xf32>, vector<16x8xf32>, vector<16x8xf32> -> vector<16x8xf32>
    %233 = vector.extract_strided_slice %157 {offsets = [24, 0], sizes = [8, 32], strides = [1, 1]} : vector<32x32xf32> to vector<8x32xf32>
    %cst_75 = arith.constant dense<0.000000e+00> : vector<16x32xf32>
    %234 = tpu.matmul %232, %233, %cst_75 {dimension_numbers = #tpu.dot_dimension_numbers<[1], [0], [0], [1], [0, 0, 1, 1], [], []>} : vector<16x8xf32>, vector<8x32xf32>, vector<16x32xf32> -> vector<16x32xf32>
    %235 = arith.addf %216, %234 : vector<16x32xf32>
    %236 = arith.addf %151, %235 : vector<16x32xf32>
    %c352 = arith.constant 352 : index
    %c0_76 = arith.constant 0 : index
    %237 = vector.load %arg2[%c352, %c0_76] : memref<536x128xf32, #tpu.memory_space<vmem>>, vector<1x32xf32>
    %c360 = arith.constant 360 : index
    %c0_77 = arith.constant 0 : index
    %238 = vector.load %arg2[%c360, %c0_77] : memref<536x128xf32, #tpu.memory_space<vmem>>, vector<1x32xf32>
    %cst_78 = arith.constant dense<0.000000e+00> : vector<16xf32>
    %239 = vector.multi_reduction <add>, %236, %cst_78 [1] : vector<16x32xf32> to vector<16xf32>
    %240 = vector.shape_cast %239 : vector<16xf32> to vector<16x1xf32>
    %cst_79 = arith.constant 3.200000e+01 : f32
    %241 = vector.broadcast %cst_79 : f32 to vector<16x1xf32>
    %242 = arith.divf %240, %241 : vector<16x1xf32>
    %243 = vector.broadcast %242 : vector<16x1xf32> to vector<16x32xf32>
    %244 = arith.subf %236, %243 : vector<16x32xf32>
    %245 = arith.mulf %244, %244 : vector<16x32xf32>
    %cst_80 = arith.constant dense<0.000000e+00> : vector<16xf32>
    %246 = vector.multi_reduction <add>, %245, %cst_80 [1] : vector<16x32xf32> to vector<16xf32>
    %247 = vector.shape_cast %246 : vector<16xf32> to vector<16x1xf32>
    %cst_81 = arith.constant 3.200000e+01 : f32
    %248 = vector.broadcast %cst_81 : f32 to vector<16x1xf32>
    %249 = arith.divf %247, %248 : vector<16x1xf32>
    %250 = vector.broadcast %242 : vector<16x1xf32> to vector<16x32xf32>
    %251 = arith.subf %236, %250 : vector<16x32xf32>
    %cst_82 = arith.constant 9.99999974E-6 : f32
    %252 = vector.broadcast %cst_82 : f32 to vector<16x1xf32>
    %253 = arith.addf %249, %252 : vector<16x1xf32>
    %254 = math.rsqrt %253 : vector<16x1xf32>
    %255 = vector.broadcast %254 : vector<16x1xf32> to vector<16x32xf32>
    %256 = arith.mulf %251, %255 : vector<16x32xf32>
    %257 = vector.broadcast %237 : vector<1x32xf32> to vector<16x32xf32>
    %258 = arith.mulf %256, %257 : vector<16x32xf32>
    %259 = vector.broadcast %238 : vector<1x32xf32> to vector<16x32xf32>
    %260 = arith.addf %258, %259 : vector<16x32xf32>
    %c384 = arith.constant 384 : index
    %c0_83 = arith.constant 0 : index
    %261 = vector.load %arg2[%c384, %c0_83] : memref<536x128xf32, #tpu.memory_space<vmem>>, vector<32x64xf32>
    %cst_84 = arith.constant dense<0.000000e+00> : vector<16x64xf32>
    %262 = tpu.matmul %260, %261, %cst_84 {dimension_numbers = #tpu.dot_dimension_numbers<[1], [0], [0], [1], [0, 0, 1, 1], [], []>} : vector<16x32xf32>, vector<32x64xf32>, vector<16x64xf32> -> vector<16x64xf32>
    %c416 = arith.constant 416 : index
    %c0_85 = arith.constant 0 : index
    %263 = vector.load %arg2[%c416, %c0_85] : memref<536x128xf32, #tpu.memory_space<vmem>>, vector<1x64xf32>
    %264 = vector.broadcast %263 : vector<1x64xf32> to vector<16x64xf32>
    %265 = arith.addf %262, %264 : vector<16x64xf32>
    %cst_86 = arith.constant 0.000000e+00 : f32
    %266 = vector.broadcast %cst_86 : f32 to vector<16x64xf32>
    %267 = arith.maximumf %265, %266 : vector<16x64xf32>
    %c424 = arith.constant 424 : index
    %c0_87 = arith.constant 0 : index
    %268 = vector.load %arg2[%c424, %c0_87] : memref<536x128xf32, #tpu.memory_space<vmem>>, vector<64x32xf32>
    %cst_88 = arith.constant dense<0.000000e+00> : vector<16x32xf32>
    %269 = tpu.matmul %267, %268, %cst_88 {dimension_numbers = #tpu.dot_dimension_numbers<[1], [0], [0], [1], [0, 0, 1, 1], [], []>} : vector<16x64xf32>, vector<64x32xf32>, vector<16x32xf32> -> vector<16x32xf32>
    %c488 = arith.constant 488 : index
    %c0_89 = arith.constant 0 : index
    %270 = vector.load %arg2[%c488, %c0_89] : memref<536x128xf32, #tpu.memory_space<vmem>>, vector<1x32xf32>
    %271 = vector.broadcast %270 : vector<1x32xf32> to vector<16x32xf32>
    %272 = arith.addf %269, %271 : vector<16x32xf32>
    %273 = arith.addf %260, %272 : vector<16x32xf32>
    %c368 = arith.constant 368 : index
    %c0_90 = arith.constant 0 : index
    %274 = vector.load %arg2[%c368, %c0_90] : memref<536x128xf32, #tpu.memory_space<vmem>>, vector<1x32xf32>
    %c376 = arith.constant 376 : index
    %c0_91 = arith.constant 0 : index
    %275 = vector.load %arg2[%c376, %c0_91] : memref<536x128xf32, #tpu.memory_space<vmem>>, vector<1x32xf32>
    %cst_92 = arith.constant dense<0.000000e+00> : vector<16xf32>
    %276 = vector.multi_reduction <add>, %273, %cst_92 [1] : vector<16x32xf32> to vector<16xf32>
    %277 = vector.shape_cast %276 : vector<16xf32> to vector<16x1xf32>
    %cst_93 = arith.constant 3.200000e+01 : f32
    %278 = vector.broadcast %cst_93 : f32 to vector<16x1xf32>
    %279 = arith.divf %277, %278 : vector<16x1xf32>
    %280 = vector.broadcast %279 : vector<16x1xf32> to vector<16x32xf32>
    %281 = arith.subf %273, %280 : vector<16x32xf32>
    %282 = arith.mulf %281, %281 : vector<16x32xf32>
    %cst_94 = arith.constant dense<0.000000e+00> : vector<16xf32>
    %283 = vector.multi_reduction <add>, %282, %cst_94 [1] : vector<16x32xf32> to vector<16xf32>
    %284 = vector.shape_cast %283 : vector<16xf32> to vector<16x1xf32>
    %cst_95 = arith.constant 3.200000e+01 : f32
    %285 = vector.broadcast %cst_95 : f32 to vector<16x1xf32>
    %286 = arith.divf %284, %285 : vector<16x1xf32>
    %287 = vector.broadcast %279 : vector<16x1xf32> to vector<16x32xf32>
    %288 = arith.subf %273, %287 : vector<16x32xf32>
    %cst_96 = arith.constant 9.99999974E-6 : f32
    %289 = vector.broadcast %cst_96 : f32 to vector<16x1xf32>
    %290 = arith.addf %286, %289 : vector<16x1xf32>
    %291 = math.rsqrt %290 : vector<16x1xf32>
    %292 = vector.broadcast %291 : vector<16x1xf32> to vector<16x32xf32>
    %293 = arith.mulf %288, %292 : vector<16x32xf32>
    %294 = vector.broadcast %274 : vector<1x32xf32> to vector<16x32xf32>
    %295 = arith.mulf %293, %294 : vector<16x32xf32>
    %296 = vector.broadcast %275 : vector<1x32xf32> to vector<16x32xf32>
    %297 = arith.addf %295, %296 : vector<16x32xf32>
    %298 = vector.extract_strided_slice %297 {offsets = [7, 0], sizes = [1, 32], strides = [1, 1]} : vector<16x32xf32> to vector<1x32xf32>
    %299 = vector.extract_strided_slice %297 {offsets = [15, 0], sizes = [1, 32], strides = [1, 1]} : vector<16x32xf32> to vector<1x32xf32>
    %300 = tpu.concatenate %298, %299 in 0 : vector<1x32xf32>, vector<1x32xf32> -> vector<2x32xf32>
    %c496 = arith.constant 496 : index
    %c0_97 = arith.constant 0 : index
    %301 = vector.load %arg2[%c496, %c0_97] : memref<536x128xf32, #tpu.memory_space<vmem>>, vector<32x8xf32>
    %cst_98 = arith.constant dense<0.000000e+00> : vector<2x8xf32>
    %302 = tpu.matmul %300, %301, %cst_98 {dimension_numbers = #tpu.dot_dimension_numbers<[1], [0], [0], [1], [0, 0, 1, 1], [], []>} : vector<2x32xf32>, vector<32x8xf32>, vector<2x8xf32> -> vector<2x8xf32>
    %c528 = arith.constant 528 : index
    %c0_99 = arith.constant 0 : index
    %303 = vector.load %arg2[%c528, %c0_99] : memref<536x128xf32, #tpu.memory_space<vmem>>, vector<1x8xf32>
    %304 = vector.broadcast %303 : vector<1x8xf32> to vector<2x8xf32>
    %305 = arith.addf %302, %304 : vector<2x8xf32>
    %c0_100 = arith.constant 0 : index
    %c0_101 = arith.constant 0 : index
    %306 = vector.load %arg3[%c0_100, %c0_101] : memref<2x8xf32, #tpu.memory_space<vmem>>, vector<2x8xf32>
    tpu.vector_store %arg3[%c0_100, %c0_101], %305 {strides = array<i32>} : memref<2x8xf32, #tpu.memory_space<vmem>>, vector<2x8xf32>,
    return
  }
  func.func @transform_0(%arg0: i32) -> (i32, i32) {
    %c0_i32 = arith.constant 0 : i32
    %c0_i32_0 = arith.constant 0 : i32
    %c0_i32_1 = arith.constant 0 : i32
    return %c0_i32, %c0_i32_0 : i32, i32
  }
  func.func @transform_1(%arg0: i32) -> (i32, i32) {
    %c0_i32 = arith.constant 0 : i32
    %c0_i32_0 = arith.constant 0 : i32
    %c0_i32_1 = arith.constant 0 : i32
    return %c0_i32, %c0_i32_0 : i32, i32
  }
  func.func @transform_2(%arg0: i32) -> (i32, i32) {
    %c0_i32 = arith.constant 0 : i32
    %c0_i32_0 = arith.constant 0 : i32
    %c0_i32_1 = arith.constant 0 : i32
    return %c0_i32, %c0_i32_0 : i32, i32
  }
}

</mosaic_0001>

<llo_original>
// kernel: tpu_custom_call.1
$region0: #{tpu_custom_call.1}
  #allocation0 [shape = 'u32[]', space=smem, size = 0x4, offset = 0x4, fixed_abs, tag = 'smem constant byte address 0x4 - core index']
  #allocation1 [shape = 'u32[72,128]{1,0:T(1,128)}', space=vmem, size = 0x9000, scoped, tag = 'internal scratch']
  %s0 = inlined_call_operand.hbm [shape: f32[16,16], index: 0, kind: input, shape index: {}]
  %s1 = inlined_call_operand.hbm [shape: f32[536,128], index: 1, kind: input, shape index: {}]
  %s2 = inlined_call_operand.hbm [shape: f32[2,8], index: 2, kind: output, shape index: {}]
  %s3 = sld [smem:[#allocation0]]
  $region26: #{tpu_custom_call.1} parent=0
    _
  %s5 = ssub.s32 1, %s3
  %s6 = scalar_select 0, %s5, %s3
  $region1: #{tpu_custom_call.1} parent=0
    #allocation2 [shape = 'u8[8192]{0}', space=vmem, size = 0x2000, scoped, tag = 'input window, operand 0, single buffered']
    #allocation3 [shape = 's32[1]{0}', space=sflag, size = 0x4, scoped, tag = 'scoped memory for tpu_custom_call.1']
    #allocation4 [shape = 's32[1]{0}', space=sflag, size = 0x4, scoped, tag = 'scoped memory for tpu_custom_call.1']
    #allocation5 [shape = 'u8[274432]{0}', space=vmem, size = 0x43000, scoped, tag = 'input window, operand 1, single buffered']
    #allocation6 [shape = 's32[1]{0}', space=sflag, size = 0x4, scoped, tag = 'scoped memory for tpu_custom_call.1']
    #allocation7 [shape = 'u8[1024]{0}', space=vmem, size = 0x400, scoped, tag = 'output window, operand 0, single buffered']
    %7 = vsyncpa [#allocation3], 0
    %8 = vsyncpa [#allocation6], 0
    %9 = vsyncpa [#allocation4], 0
    // Predicated region
    $region2: #{tpu_custom_call.1} parent=1 // pred_check
      _
    $region3: #{tpu_custom_call.1} parent=1 // pred_check_branch
      %11 = sbr.rel (0) target = $region5
    $region4: #{tpu_custom_call.1} parent=1 // pred_region
      %13 = vsyncadd [#allocation3], 0
      %s14 = sshll.u32 %s0, 4
      %s15 = int_to_ptr.hbm [resolvable:$true] %s14
      %s16 = sshll.u32 [#allocation2], 4
      %s17 = int_to_ptr.vmem [resolvable:$true] %s16
      %22 = dma.hbm_to_vmem [thread:$0]  %s15, 256, %s17, [#allocation3], 128, 128, 8
    $region5: #{tpu_custom_call.1} parent=1 // pred_fallthru
      _
    // Predicated region
    $region6: #{tpu_custom_call.1} parent=1 // pred_check
      _
    $region7: #{tpu_custom_call.1} parent=1 // pred_check_branch
      %24 = sbr.rel (0) target = $region9
    $region8: #{tpu_custom_call.1} parent=1 // pred_region
      %26 = vsyncadd [#allocation6], 0
      %s27 = sshll.u32 %s1, 4
      %s28 = int_to_ptr.hbm [resolvable:$true] %s27
      %s29 = sshll.u32 [#allocation5], 4
      %s30 = int_to_ptr.vmem [resolvable:$true] %s29
      %35 = dma.hbm_to_vmem [thread:$0]  %s28, 8576, %s30, [#allocation6], 128, 128, 8
    $region9: #{tpu_custom_call.1} parent=1 // pred_fallthru
      _
    // Predicated region
    $region10: #{tpu_custom_call.1} parent=1 // pred_check
      _
    $region11: #{tpu_custom_call.1} parent=1 // pred_check_branch
      %37 = sbr.rel (0) target = $region13
    $region12: #{tpu_custom_call.1} parent=1 // pred_region
      %39 = dma.done [#allocation3], 256
    $region13: #{tpu_custom_call.1} parent=1 // pred_fallthru
      _
    // Predicated region
    $region14: #{tpu_custom_call.1} parent=1 // pred_check
      _
    $region15: #{tpu_custom_call.1} parent=1 // pred_check_branch
      %41 = sbr.rel (0) target = $region17
    $region16: #{tpu_custom_call.1} parent=1 // pred_region
      %43 = dma.done [#allocation6], 8576
    $region17: #{tpu_custom_call.1} parent=1 // pred_fallthru
      _
    %v44 = vld [vmem:[#allocation5 + $0x10] sm:$0xff]
    %v45 = vld [vmem:[#allocation5 + $0x18] sm:$0xff]
    %v46 = vld [vmem:[#allocation2] sm:$0xff]
    %v47 = vld [vmem:[#allocation2 + $0x8] sm:$0xff]
    %v48 = vld [vmem:[#allocation5 + $0x20] sm:$0xff]
    %v49 = vld [vmem:[#allocation5 + $0x28] sm:$0xff]
    %v50 = vld [vmem:[#allocation5] sm:$0xff]
    %v51 = vld [vmem:[#allocation5 + $0x8] sm:$0xff]
    %vm52 = vcmask 130048
    %v54 = vsel %vm52, %v46, 0
    %v57 = vsel %vm52, %v47, 0
    %59 = vmatpush.msra.mxu0 0.0
    %60 = vmatpush.msra.mxu0 0.0
    %61 = vmatpush.msra.mxu0 0.0
    %62 = vmatpush.msra.mxu0 0.0
    %63 = vmatpush.msra.mxu0 0.0
    %64 = vmatpush.msra.mxu0 0.0
    %65 = vmatpush.msra.mxu0 0.0
    %66 = vmatpush.msra.mxu0 0.0
    %67 = vmatpush.msra.mxu0 0.0
    %68 = vmatpush.msra.mxu0 0.0
    %69 = vmatpush.msra.mxu0 0.0
    %70 = vmatpush.msra.mxu0 0.0
    %71 = vmatpush.msra.mxu0 0.0
    %72 = vmatpush.msra.mxu0 0.0
    %73 = vmatpush.msra.mxu0 %v49
    %74 = vmatpush.msra.mxu0 %v48
    %75 = vmatmul.f32.gmra.mxu0 %v54
    %v76 = vpop.f32.mrf.mxu0
    %v77 = vadd.f32 %v50, %v76
    %78 = vmatmul.f32.gmra.mxu0 %v57
    %v79 = vpop.f32.mrf.mxu0
    %v80 = vadd.f32 %v51, %v79
    %81 = vdwg.mxu0
    %v82 = vld [vmem:[#allocation5 + $0x30] sm:$0xff]
    %v83 = vld [vmem:[#allocation5 + $0x38] sm:$0xff]
    %v84 = vld [vmem:[#allocation5 + $0x40] sm:$0xff]
    %v85 = vld [vmem:[#allocation5 + $0x48] sm:$0xff]
    %v86 = vld [vmem:[#allocation5 + $0x50] sm:$0x1]
    %v87 = vperm.slane %v86, 0
    %vm88 = vcmask 261120
    %v90 = vsel %vm88, %v77, 0
    %v93 = vsel %vm88, %v80, 0
    %95 = vmatpush.msra.mxu0 0.0
    %96 = vmatpush.msra.mxu0 0.0
    %97 = vmatpush.msra.mxu0 0.0
    %98 = vmatpush.msra.mxu0 0.0
    %99 = vmatpush.msra.mxu0 0.0
    %100 = vmatpush.msra.mxu0 0.0
    %101 = vmatpush.msra.mxu0 0.0
    %102 = vmatpush.msra.mxu0 0.0
    %103 = vmatpush.msra.mxu0 0.0
    %104 = vmatpush.msra.mxu0 0.0
    %105 = vmatpush.msra.mxu0 0.0
    %106 = vmatpush.msra.mxu0 0.0
    %107 = vmatpush.msra.mxu0 %v85
    %108 = vmatpush.msra.mxu0 %v84
    %109 = vmatpush.msra.mxu0 %v83
    %110 = vmatpush.msra.mxu0 %v82
    %111 = vmatmul.f32.gmra.mxu0 %v90
    %v112 = vpop.f32.mrf.mxu0
    %v113 = vadd.f32 %v87, %v112
    %114 = vmatmul.f32.gmra.mxu0 %v93
    %v115 = vpop.f32.mrf.mxu0
    %v116 = vadd.f32 %v87, %v115
    %117 = vdwg.mxu0
    %v118 = vld [vmem:[#allocation5 + $0x58] sm:$0xff]
    %v119 = vld [vmem:[#allocation5 + $0x60] sm:$0xff]
    %v120 = vld [vmem:[#allocation5 + $0x68] sm:$0xff]
    %v121 = vld [vmem:[#allocation5 + $0x70] sm:$0xff]
    %v122 = vld [vmem:[#allocation5 + $0x78] sm:$0x1]
    %125 = vrot.lane.b32.xlu0 %v113, 96
    %v126 = vpop.permute.xlu0 %125
    %127 = vrot.lane.b32.xlu0 %v116, 96
    %v128 = vpop.permute.xlu0 %127
    %vm129 = vcmask 64512
    %v130 = vsel %vm129, %v113, 0
    %v132 = vsel %vm129, %v116, 0
    %v134 = vsel %vm129, %v126, 0
    %v136 = vsel %vm129, %v128, 0
    %138 = vmatpush.xpose.msra.mxu0 0.0
    %139 = vmatpush.xpose.msra.mxu0 0.0
    %140 = vmatpush.xpose.msra.mxu0 0.0
    %141 = vmatpush.xpose.msra.mxu0 0.0
    %142 = vmatpush.xpose.msra.mxu0 0.0
    %143 = vmatpush.xpose.msra.mxu0 0.0
    %144 = vmatpush.xpose.msra.mxu0 0.0
    %145 = vmatpush.xpose.msra.mxu0 0.0
    %146 = vmatpush.xpose.msra.mxu0 0.0
    %147 = vmatpush.xpose.msra.mxu0 0.0
    %148 = vmatpush.xpose.msra.mxu0 0.0
    %149 = vmatpush.xpose.msra.mxu0 0.0
    %150 = vmatpush.xpose.msra.mxu0 0.0
    %151 = vmatpush.xpose.msra.mxu0 0.0
    %152 = vmatpush.xpose.msra.mxu0 %v136
    %153 = vmatpush.xpose.msra.mxu0 %v134
    %154 = vmatmul.f32.gmra.mxu0 %v130
    %v155 = vpop.f32.mrf.mxu0
    %v156 = vadd.f32 %v44, %v155
    %157 = vmatmul.f32.gmra.mxu0 %v132
    %v158 = vpop.f32.mrf.mxu0
    %v159 = vadd.f32 %v45, %v158
    %160 = vdwg.mxu0
    %v161 = vsel %vm52, %v156, -inf
    %162 = vmax.xlane.f32.xlu0 %v161
    %v163 = vpop.xlane.xlu0 %162
    %v164 = vsel %vm52, %v159, -inf
    %165 = vmax.xlane.f32.xlu0 %v164
    %v166 = vpop.xlane.xlu0 %165
    %v167 = vsub.f32 %v156, %v163
    %v168 = vsub.f32 %v159, %v166
    %v169 = vmul.f32 %v167, 1.442695
    %v170 = vpow.pop %v169
    %v171 = vmul.f32 %v168, 1.442695
    %v172 = vpow.pop %v171
    %v173 = vsel %vm52, %v170, 0.0
    %174 = vadd.xlane.f32.xlu0 %v173
    %v175 = vpop.xlane.xlu0 %174
    %v176 = vsel %vm52, %v172, 0.0
    %177 = vadd.xlane.f32.xlu0 %v176
    %v178 = vpop.xlane.xlu0 %177
    %v179 = vrcp.pop %v175
    %v180 = vrcp.pop %v178
    %v181 = vmul.f32 %v170, %v179
    %v182 = vmul.f32 %v172, %v180
    %183 = vrot.lane.b32.xlu0 %v113, 64
    %v184 = vpop.permute.xlu0 %183
    %185 = vrot.lane.b32.xlu0 %v116, 64
    %v186 = vpop.permute.xlu0 %185
    %v190 = vsel %vm52, %v181, 0
    %v193 = vsel %vm52, %v182, 0
    %195 = vmatpush.msra.mxu0 0.0
    %196 = vmatpush.msra.mxu0 0.0
    %197 = vmatpush.msra.mxu0 0.0
    %198 = vmatpush.msra.mxu0 0.0
    %199 = vmatpush.msra.mxu0 0.0
    %200 = vmatpush.msra.mxu0 0.0
    %201 = vmatpush.msra.mxu0 0.0
    %202 = vmatpush.msra.mxu0 0.0
    %203 = vmatpush.msra.mxu0 0.0
    %204 = vmatpush.msra.mxu0 0.0
    %205 = vmatpush.msra.mxu0 0.0
    %206 = vmatpush.msra.mxu0 0.0
    %207 = vmatpush.msra.mxu0 0.0
    %208 = vmatpush.msra.mxu0 0.0
    %209 = vmatpush.msra.mxu0 %v186
    %210 = vmatpush.msra.mxu0 %v184
    %211 = vmatmul.f32.gmra.mxu0 %v190
    %v212 = vpop.f32.mrf.mxu0
    %v213 = vadd.f32 0.0, %v212
    %214 = vmatmul.f32.gmra.mxu0 %v193
    %v215 = vpop.f32.mrf.mxu0
    %v216 = vadd.f32 0.0, %v215
    %217 = vdwg.mxu0
    %v219 = vsel %vm129, %v213, 0
    %v222 = vsel %vm129, %v216, 0
    %224 = vmatpush.msra.mxu0 0.0
    %225 = vmatpush.msra.mxu0 0.0
    %226 = vmatpush.msra.mxu0 0.0
    %227 = vmatpush.msra.mxu0 0.0
    %228 = vmatpush.msra.mxu0 0.0
    %229 = vmatpush.msra.mxu0 0.0
    %230 = vmatpush.msra.mxu0 0.0
    %231 = vmatpush.msra.mxu0 0.0
    %232 = vmatpush.msra.mxu0 0.0
    %233 = vmatpush.msra.mxu0 0.0
    %234 = vmatpush.msra.mxu0 0.0
    %235 = vmatpush.msra.mxu0 0.0
    %236 = vmatpush.msra.mxu0 0.0
    %237 = vmatpush.msra.mxu0 0.0
    %238 = vmatpush.msra.mxu0 0.0
    %239 = vmatpush.msra.mxu0 %v118
    %240 = vmatmul.f32.gmra.mxu0 %v219
    %v241 = vpop.f32.mrf.mxu0
    %v242 = vadd.f32 0.0, %v241
    %243 = vmatmul.f32.gmra.mxu0 %v222
    %v244 = vpop.f32.mrf.mxu0
    %v245 = vadd.f32 0.0, %v244
    %246 = vdwg.mxu0
    %v247 = vperm.slane %v122, 0
    %v248 = vadd.f32 %v247, %v242
    %v249 = vadd.f32 %v247, %v245
    %250 = vrot.lane.b32.xlu0 %v113, 120
    %v251 = vpop.permute.xlu0 %250
    %252 = vrot.lane.b32.xlu0 %v116, 120
    %v253 = vpop.permute.xlu0 %252
    %254 = vrot.lane.b32.xlu0 %v113, 88
    %v255 = vpop.permute.xlu0 %254
    %256 = vrot.lane.b32.xlu0 %v116, 88
    %v257 = vpop.permute.xlu0 %256
    %v258 = vsel %vm129, %v251, 0
    %v260 = vsel %vm129, %v253, 0
    %v262 = vsel %vm129, %v255, 0
    %v264 = vsel %vm129, %v257, 0
    %266 = vmatpush.xpose.msra.mxu0 0.0
    %267 = vmatpush.xpose.msra.mxu0 0.0
    %268 = vmatpush.xpose.msra.mxu0 0.0
    %269 = vmatpush.xpose.msra.mxu0 0.0
    %270 = vmatpush.xpose.msra.mxu0 0.0
    %271 = vmatpush.xpose.msra.mxu0 0.0
    %272 = vmatpush.xpose.msra.mxu0 0.0
    %273 = vmatpush.xpose.msra.mxu0 0.0
    %274 = vmatpush.xpose.msra.mxu0 0.0
    %275 = vmatpush.xpose.msra.mxu0 0.0
    %276 = vmatpush.xpose.msra.mxu0 0.0
    %277 = vmatpush.xpose.msra.mxu0 0.0
    %278 = vmatpush.xpose.msra.mxu0 0.0
    %279 = vmatpush.xpose.msra.mxu0 0.0
    %280 = vmatpush.xpose.msra.mxu0 %v264
    %281 = vmatpush.xpose.msra.mxu0 %v262
    %282 = vmatmul.f32.gmra.mxu0 %v258
    %v283 = vpop.f32.mrf.mxu0
    %v284 = vadd.f32 %v44, %v283
    %285 = vmatmul.f32.gmra.mxu0 %v260
    %v286 = vpop.f32.mrf.mxu0
    %v287 = vadd.f32 %v45, %v286
    %288 = vdwg.mxu0
    %v289 = vsel %vm52, %v284, -inf
    %290 = vmax.xlane.f32.xlu0 %v289
    %v291 = vpop.xlane.xlu0 %290
    %v292 = vsel %vm52, %v287, -inf
    %293 = vmax.xlane.f32.xlu0 %v292
    %v294 = vpop.xlane.xlu0 %293
    %v295 = vsub.f32 %v284, %v291
    %v296 = vsub.f32 %v287, %v294
    %v297 = vmul.f32 %v295, 1.442695
    %v298 = vpow.pop %v297
    %v299 = vmul.f32 %v296, 1.442695
    %v300 = vpow.pop %v299
    %v301 = vsel %vm52, %v298, 0.0
    %302 = vadd.xlane.f32.xlu0 %v301
    %v303 = vpop.xlane.xlu0 %302
    %v304 = vsel %vm52, %v300, 0.0
    %305 = vadd.xlane.f32.xlu0 %v304
    %v306 = vpop.xlane.xlu0 %305
    %v307 = vrcp.pop %v303
    %v308 = vrcp.pop %v306
    %v309 = vmul.f32 %v298, %v307
    %v310 = vmul.f32 %v300, %v308
    %311 = vrot.lane.b32.xlu0 %v113, 56
    %v312 = vpop.permute.xlu0 %311
    %313 = vrot.lane.b32.xlu0 %v116, 56
    %v314 = vpop.permute.xlu0 %313
    %v318 = vsel %vm52, %v309, 0
    %v321 = vsel %vm52, %v310, 0
    %323 = vmatpush.msra.mxu0 0.0
    %324 = vmatpush.msra.mxu0 0.0
    %325 = vmatpush.msra.mxu0 0.0
    %326 = vmatpush.msra.mxu0 0.0
    %327 = vmatpush.msra.mxu0 0.0
    %328 = vmatpush.msra.mxu0 0.0
    %329 = vmatpush.msra.mxu0 0.0
    %330 = vmatpush.msra.mxu0 0.0
    %331 = vmatpush.msra.mxu0 0.0
    %332 = vmatpush.msra.mxu0 0.0
    %333 = vmatpush.msra.mxu0 0.0
    %334 = vmatpush.msra.mxu0 0.0
    %335 = vmatpush.msra.mxu0 0.0
    %336 = vmatpush.msra.mxu0 0.0
    %337 = vmatpush.msra.mxu0 %v314
    %338 = vmatpush.msra.mxu0 %v312
    %339 = vmatmul.f32.gmra.mxu0 %v318
    %v340 = vpop.f32.mrf.mxu0
    %v341 = vadd.f32 0.0, %v340
    %342 = vmatmul.f32.gmra.mxu0 %v321
    %v343 = vpop.f32.mrf.mxu0
    %v344 = vadd.f32 0.0, %v343
    %345 = vdwg.mxu0
    %v347 = vsel %vm129, %v341, 0
    %v350 = vsel %vm129, %v344, 0
    %352 = vmatpush.msra.mxu0 0.0
    %353 = vmatpush.msra.mxu0 0.0
    %354 = vmatpush.msra.mxu0 0.0
    %355 = vmatpush.msra.mxu0 0.0
    %356 = vmatpush.msra.mxu0 0.0
    %357 = vmatpush.msra.mxu0 0.0
    %358 = vmatpush.msra.mxu0 0.0
    %359 = vmatpush.msra.mxu0 0.0
    %360 = vmatpush.msra.mxu0 0.0
    %361 = vmatpush.msra.mxu0 0.0
    %362 = vmatpush.msra.mxu0 0.0
    %363 = vmatpush.msra.mxu0 0.0
    %364 = vmatpush.msra.mxu0 0.0
    %365 = vmatpush.msra.mxu0 0.0
    %366 = vmatpush.msra.mxu0 0.0
    %367 = vmatpush.msra.mxu0 %v119
    %368 = vmatmul.f32.gmra.mxu0 %v347
    %v369 = vpop.f32.mrf.mxu0
    %v370 = vadd.f32 0.0, %v369
    %371 = vmatmul.f32.gmra.mxu0 %v350
    %v372 = vpop.f32.mrf.mxu0
    %v373 = vadd.f32 0.0, %v372
    %374 = vdwg.mxu0
    %v375 = vadd.f32 %v248, %v370
    %v376 = vadd.f32 %v249, %v373
    %377 = vrot.lane.b32.xlu0 %v113, 112
    %v378 = vpop.permute.xlu0 %377
    %379 = vrot.lane.b32.xlu0 %v116, 112
    %v380 = vpop.permute.xlu0 %379
    %381 = vrot.lane.b32.xlu0 %v113, 80
    %v382 = vpop.permute.xlu0 %381
    %383 = vrot.lane.b32.xlu0 %v116, 80
    %v384 = vpop.permute.xlu0 %383
    %v385 = vsel %vm129, %v378, 0
    %v387 = vsel %vm129, %v380, 0
    %v389 = vsel %vm129, %v382, 0
    %v391 = vsel %vm129, %v384, 0
    %393 = vmatpush.xpose.msra.mxu0 0.0
    %394 = vmatpush.xpose.msra.mxu0 0.0
    %395 = vmatpush.xpose.msra.mxu0 0.0
    %396 = vmatpush.xpose.msra.mxu0 0.0
    %397 = vmatpush.xpose.msra.mxu0 0.0
    %398 = vmatpush.xpose.msra.mxu0 0.0
    %399 = vmatpush.xpose.msra.mxu0 0.0
    %400 = vmatpush.xpose.msra.mxu0 0.0
    %401 = vmatpush.xpose.msra.mxu0 0.0
    %402 = vmatpush.xpose.msra.mxu0 0.0
    %403 = vmatpush.xpose.msra.mxu0 0.0
    %404 = vmatpush.xpose.msra.mxu0 0.0
    %405 = vmatpush.xpose.msra.mxu0 0.0
    %406 = vmatpush.xpose.msra.mxu0 0.0
    %407 = vmatpush.xpose.msra.mxu0 %v391
    %408 = vmatpush.xpose.msra.mxu0 %v389
    %409 = vmatmul.f32.gmra.mxu0 %v385
    %v410 = vpop.f32.mrf.mxu0
    %v411 = vadd.f32 %v44, %v410
    %412 = vmatmul.f32.gmra.mxu0 %v387
    %v413 = vpop.f32.mrf.mxu0
    %v414 = vadd.f32 %v45, %v413
    %415 = vdwg.mxu0
    %v416 = vsel %vm52, %v411, -inf
    %417 = vmax.xlane.f32.xlu0 %v416
    %v418 = vpop.xlane.xlu0 %417
    %v419 = vsel %vm52, %v414, -inf
    %420 = vmax.xlane.f32.xlu0 %v419
    %v421 = vpop.xlane.xlu0 %420
    %v422 = vsub.f32 %v411, %v418
    %v423 = vsub.f32 %v414, %v421
    %v424 = vmul.f32 %v422, 1.442695
    %v425 = vpow.pop %v424
    %v426 = vmul.f32 %v423, 1.442695
    %v427 = vpow.pop %v426
    %v428 = vsel %vm52, %v425, 0.0
    %429 = vadd.xlane.f32.xlu0 %v428
    %v430 = vpop.xlane.xlu0 %429
    %v431 = vsel %vm52, %v427, 0.0
    %432 = vadd.xlane.f32.xlu0 %v431
    %v433 = vpop.xlane.xlu0 %432
    %v434 = vrcp.pop %v430
    %v435 = vrcp.pop %v433
    %v436 = vmul.f32 %v425, %v434
    %v437 = vmul.f32 %v427, %v435
    %438 = vrot.lane.b32.xlu0 %v113, 48
    %v439 = vpop.permute.xlu0 %438
    %440 = vrot.lane.b32.xlu0 %v116, 48
    %v441 = vpop.permute.xlu0 %440
    %v445 = vsel %vm52, %v436, 0
    %v448 = vsel %vm52, %v437, 0
    %450 = vmatpush.msra.mxu0 0.0
    %451 = vmatpush.msra.mxu0 0.0
    %452 = vmatpush.msra.mxu0 0.0
    %453 = vmatpush.msra.mxu0 0.0
    %454 = vmatpush.msra.mxu0 0.0
    %455 = vmatpush.msra.mxu0 0.0
    %456 = vmatpush.msra.mxu0 0.0
    %457 = vmatpush.msra.mxu0 0.0
    %458 = vmatpush.msra.mxu0 0.0
    %459 = vmatpush.msra.mxu0 0.0
    %460 = vmatpush.msra.mxu0 0.0
    %461 = vmatpush.msra.mxu0 0.0
    %462 = vmatpush.msra.mxu0 0.0
    %463 = vmatpush.msra.mxu0 0.0
    %464 = vmatpush.msra.mxu0 %v441
    %465 = vmatpush.msra.mxu0 %v439
    %466 = vmatmul.f32.gmra.mxu0 %v445
    %v467 = vpop.f32.mrf.mxu0
    %v468 = vadd.f32 0.0, %v467
    %469 = vmatmul.f32.gmra.mxu0 %v448
    %v470 = vpop.f32.mrf.mxu0
    %v471 = vadd.f32 0.0, %v470
    %472 = vdwg.mxu0
    %v474 = vsel %vm129, %v468, 0
    %v477 = vsel %vm129, %v471, 0
    %479 = vmatpush.msra.mxu0 0.0
    %480 = vmatpush.msra.mxu0 0.0
    %481 = vmatpush.msra.mxu0 0.0
    %482 = vmatpush.msra.mxu0 0.0
    %483 = vmatpush.msra.mxu0 0.0
    %484 = vmatpush.msra.mxu0 0.0
    %485 = vmatpush.msra.mxu0 0.0
    %486 = vmatpush.msra.mxu0 0.0
    %487 = vmatpush.msra.mxu0 0.0
    %488 = vmatpush.msra.mxu0 0.0
    %489 = vmatpush.msra.mxu0 0.0
    %490 = vmatpush.msra.mxu0 0.0
    %491 = vmatpush.msra.mxu0 0.0
    %492 = vmatpush.msra.mxu0 0.0
    %493 = vmatpush.msra.mxu0 0.0
    %494 = vmatpush.msra.mxu0 %v120
    %495 = vmatmul.f32.gmra.mxu0 %v474
    %v496 = vpop.f32.mrf.mxu0
    %v497 = vadd.f32 0.0, %v496
    %498 = vmatmul.f32.gmra.mxu0 %v477
    %v499 = vpop.f32.mrf.mxu0
    %v500 = vadd.f32 0.0, %v499
    %501 = vdwg.mxu0
    %v502 = vadd.f32 %v375, %v497
    %v503 = vadd.f32 %v376, %v500
    %504 = vrot.lane.b32.xlu0 %v113, 104
    %v505 = vpop.permute.xlu0 %504
    %506 = vrot.lane.b32.xlu0 %v116, 104
    %v507 = vpop.permute.xlu0 %506
    %508 = vrot.lane.b32.xlu0 %v113, 72
    %v509 = vpop.permute.xlu0 %508
    %510 = vrot.lane.b32.xlu0 %v116, 72
    %v511 = vpop.permute.xlu0 %510
    %v512 = vsel %vm129, %v505, 0
    %v514 = vsel %vm129, %v507, 0
    %v516 = vsel %vm129, %v509, 0
    %v518 = vsel %vm129, %v511, 0
    %520 = vmatpush.xpose.msra.mxu0 0.0
    %521 = vmatpush.xpose.msra.mxu0 0.0
    %522 = vmatpush.xpose.msra.mxu0 0.0
    %523 = vmatpush.xpose.msra.mxu0 0.0
    %524 = vmatpush.xpose.msra.mxu0 0.0
    %525 = vmatpush.xpose.msra.mxu0 0.0
    %526 = vmatpush.xpose.msra.mxu0 0.0
    %527 = vmatpush.xpose.msra.mxu0 0.0
    %528 = vmatpush.xpose.msra.mxu0 0.0
    %529 = vmatpush.xpose.msra.mxu0 0.0
    %530 = vmatpush.xpose.msra.mxu0 0.0
    %531 = vmatpush.xpose.msra.mxu0 0.0
    %532 = vmatpush.xpose.msra.mxu0 0.0
    %533 = vmatpush.xpose.msra.mxu0 0.0
    %534 = vmatpush.xpose.msra.mxu0 %v518
    %535 = vmatpush.xpose.msra.mxu0 %v516
    %536 = vmatmul.f32.gmra.mxu0 %v512
    %v537 = vpop.f32.mrf.mxu0
    %v538 = vadd.f32 %v44, %v537
    %539 = vmatmul.f32.gmra.mxu0 %v514
    %v540 = vpop.f32.mrf.mxu0
    %v541 = vadd.f32 %v45, %v540
    %542 = vdwg.mxu0
    %v543 = vsel %vm52, %v538, -inf
    %544 = vmax.xlane.f32.xlu0 %v543
    %v545 = vpop.xlane.xlu0 %544
    %v546 = vsel %vm52, %v541, -inf
    %547 = vmax.xlane.f32.xlu0 %v546
    %v548 = vpop.xlane.xlu0 %547
    %v549 = vsub.f32 %v538, %v545
    %v550 = vsub.f32 %v541, %v548
    %v551 = vmul.f32 %v549, 1.442695
    %v552 = vpow.pop %v551
    %v553 = vmul.f32 %v550, 1.442695
    %v554 = vpow.pop %v553
    %v555 = vsel %vm52, %v552, 0.0
    %556 = vadd.xlane.f32.xlu0 %v555
    %v557 = vpop.xlane.xlu0 %556
    %v558 = vsel %vm52, %v554, 0.0
    %559 = vadd.xlane.f32.xlu0 %v558
    %v560 = vpop.xlane.xlu0 %559
    %v561 = vrcp.pop %v557
    %v562 = vrcp.pop %v560
    %v563 = vmul.f32 %v552, %v561
    %v564 = vmul.f32 %v554, %v562
    %565 = vrot.lane.b32.xlu0 %v113, 40
    %v566 = vpop.permute.xlu0 %565
    %567 = vrot.lane.b32.xlu0 %v116, 40
    %v568 = vpop.permute.xlu0 %567
    %v572 = vsel %vm52, %v563, 0
    %v575 = vsel %vm52, %v564, 0
    %577 = vmatpush.msra.mxu0 0.0
    %578 = vmatpush.msra.mxu0 0.0
    %579 = vmatpush.msra.mxu0 0.0
    %580 = vmatpush.msra.mxu0 0.0
    %581 = vmatpush.msra.mxu0 0.0
    %582 = vmatpush.msra.mxu0 0.0
    %583 = vmatpush.msra.mxu0 0.0
    %584 = vmatpush.msra.mxu0 0.0
    %585 = vmatpush.msra.mxu0 0.0
    %586 = vmatpush.msra.mxu0 0.0
    %587 = vmatpush.msra.mxu0 0.0
    %588 = vmatpush.msra.mxu0 0.0
    %589 = vmatpush.msra.mxu0 0.0
    %590 = vmatpush.msra.mxu0 0.0
    %591 = vmatpush.msra.mxu0 %v568
    %592 = vmatpush.msra.mxu0 %v566
    %593 = vmatmul.f32.gmra.mxu0 %v572
    %v594 = vpop.f32.mrf.mxu0
    %v595 = vadd.f32 0.0, %v594
    %596 = vmatmul.f32.gmra.mxu0 %v575
    %v597 = vpop.f32.mrf.mxu0
    %v598 = vadd.f32 0.0, %v597
    %599 = vdwg.mxu0
    %v601 = vsel %vm129, %v595, 0
    %v604 = vsel %vm129, %v598, 0
    %606 = vmatpush.msra.mxu0 0.0
    %607 = vmatpush.msra.mxu0 0.0
    %608 = vmatpush.msra.mxu0 0.0
    %609 = vmatpush.msra.mxu0 0.0
    %610 = vmatpush.msra.mxu0 0.0
    %611 = vmatpush.msra.mxu0 0.0
    %612 = vmatpush.msra.mxu0 0.0
    %613 = vmatpush.msra.mxu0 0.0
    %614 = vmatpush.msra.mxu0 0.0
    %615 = vmatpush.msra.mxu0 0.0
    %616 = vmatpush.msra.mxu0 0.0
    %617 = vmatpush.msra.mxu0 0.0
    %618 = vmatpush.msra.mxu0 0.0
    %619 = vmatpush.msra.mxu0 0.0
    %620 = vmatpush.msra.mxu0 0.0
    %621 = vmatpush.msra.mxu0 %v121
    %622 = vmatmul.f32.gmra.mxu0 %v601
    %v623 = vpop.f32.mrf.mxu0
    %v624 = vadd.f32 0.0, %v623
    %625 = vmatmul.f32.gmra.mxu0 %v604
    %v626 = vpop.f32.mrf.mxu0
    %v627 = vadd.f32 0.0, %v626
    %628 = vdwg.mxu0
    %v629 = vadd.f32 %v502, %v624
    %v630 = vadd.f32 %v503, %v627
    %v631 = vadd.f32 %v77, %v629
    %v632 = vadd.f32 %v80, %v630
    %v633 = vld [vmem:[#allocation5 + $0x80] sm:$0x1]
    %v634 = vld [vmem:[#allocation5 + $0x88] sm:$0x1]
    %v635 = vsel %vm88, %v631, 0.0
    %636 = vadd.xlane.f32.xlu0 %v635
    %v637 = vpop.xlane.xlu0 %636
    %v638 = vsel %vm88, %v632, 0.0
    %639 = vadd.xlane.f32.xlu0 %v638
    %v640 = vpop.xlane.xlu0 %639
    %v641 = vrcp.pop 32.0
    %v642 = vmul.f32 32.0, %v641
    %v643 = vsub.f32 1.0, %v642
    %v644 = vmul.f32 %v641, %v643
    %v645 = vadd.f32 %v641, %v644
    %vm646 = vweird.f32 %v641
    %v647 = vsel %vm646, %v641, %v645
    %v648 = vmul.f32 %v637, %v647
    %v649 = vmul.f32 %v640, %v647
    %v650 = vsub.f32 %v631, %v648
    %v651 = vsub.f32 %v632, %v649
    %v652 = vmul.f32 %v650, %v650
    %v653 = vmul.f32 %v651, %v651
    %v654 = vsel %vm88, %v652, 0.0
    %655 = vadd.xlane.f32.xlu0 %v654
    %v656 = vpop.xlane.xlu0 %655
    %v657 = vsel %vm88, %v653, 0.0
    %658 = vadd.xlane.f32.xlu0 %v657
    %v659 = vpop.xlane.xlu0 %658
    %v660 = vmul.f32 %v656, %v647
    %v661 = vmul.f32 %v659, %v647
    %v662 = vadd.f32 %v660, 1e-05
    %v663 = vadd.f32 %v661, 1e-05
    %v664 = vrsqrt.pop %v662
    %v665 = vmul.f32 %v664, %v662
    %v666 = vmul.f32 %v665, %v664
    %v667 = vmul.f32 0.5, %v666
    %v668 = vsub.f32 1.5, %v667
    %v669 = vmul.f32 %v664, %v668
    %vm670 = vweird.f32 %v662
    %vm671 = vweird.f32 %v664
    %vm672 = vmor %vm670, %vm671
    %v673 = vsel %vm672, %v664, %v669
    %v674 = vrsqrt.pop %v663
    %v675 = vmul.f32 %v674, %v663
    %v676 = vmul.f32 %v675, %v674
    %v677 = vmul.f32 0.5, %v676
    %v678 = vsub.f32 1.5, %v677
    %v679 = vmul.f32 %v674, %v678
    %vm680 = vweird.f32 %v663
    %vm681 = vweird.f32 %v674
    %vm682 = vmor %vm680, %vm681
    %v683 = vsel %vm682, %v674, %v679
    %v684 = vmul.f32 %v650, %v673
    %v685 = vmul.f32 %v651, %v683
    %v686 = vperm.slane %v633, 0
    %v687 = vmul.f32 %v684, %v686
    %v688 = vmul.f32 %v685, %v686
    %v689 = vperm.slane %v634, 0
    %v690 = vadd.f32 %v687, %v689
    %v691 = vadd.f32 %v688, %v689
    %v692 = vld [vmem:[#allocation5 + $0xa0] sm:$0xff]
    %v693 = vld [vmem:[#allocation5 + $0xa8] sm:$0xff]
    %v694 = vld [vmem:[#allocation5 + $0xb0] sm:$0xff]
    %v695 = vld [vmem:[#allocation5 + $0xb8] sm:$0xff]
    %v696 = vld [vmem:[#allocation5 + $0xc0] sm:$0x1]
    %v697 = vperm.slane %v696, 0
    %v699 = vsel %vm88, %v690, 0
    %v702 = vsel %vm88, %v691, 0
    %704 = vmatpush.msra.mxu0 0.0
    %705 = vmatpush.msra.mxu0 0.0
    %706 = vmatpush.msra.mxu0 0.0
    %707 = vmatpush.msra.mxu0 0.0
    %708 = vmatpush.msra.mxu0 0.0
    %709 = vmatpush.msra.mxu0 0.0
    %710 = vmatpush.msra.mxu0 0.0
    %711 = vmatpush.msra.mxu0 0.0
    %712 = vmatpush.msra.mxu0 0.0
    %713 = vmatpush.msra.mxu0 0.0
    %714 = vmatpush.msra.mxu0 0.0
    %715 = vmatpush.msra.mxu0 0.0
    %716 = vmatpush.msra.mxu0 %v695
    %717 = vmatpush.msra.mxu0 %v694
    %718 = vmatpush.msra.mxu0 %v693
    %719 = vmatpush.msra.mxu0 %v692
    %720 = vmatmul.f32.gmra.mxu0 %v699
    %v721 = vpop.f32.mrf.mxu0
    %v722 = vadd.f32 %v697, %v721
    %723 = vmatmul.f32.gmra.mxu0 %v702
    %v724 = vpop.f32.mrf.mxu0
    %v725 = vadd.f32 %v697, %v724
    %726 = vdwg.mxu0
    %v727 = vmax.f32 %v722, 0.0
    %v728 = vmax.f32 %v725, 0.0
    %v729 = vld [vmem:[#allocation5 + $0xc8] sm:$0xff]
    %v730 = vld [vmem:[#allocation5 + $0xd0] sm:$0xff]
    %v731 = vld [vmem:[#allocation5 + $0xd8] sm:$0xff]
    %v732 = vld [vmem:[#allocation5 + $0xe0] sm:$0xff]
    %v733 = vld [vmem:[#allocation5 + $0xe8] sm:$0xff]
    %v734 = vld [vmem:[#allocation5 + $0xf0] sm:$0xff]
    %v735 = vld [vmem:[#allocation5 + $0xf8] sm:$0xff]
    %v736 = vld [vmem:[#allocation5 + $0x100] sm:$0xff]
    %v737 = vld [vmem:[#allocation5 + $0x108] sm:$0x1]
    %v738 = vperm.slane %v737, 0
    %vm739 = vcmask 523264
    %v741 = vsel %vm739, %v727, 0
    %v744 = vsel %vm739, %v728, 0
    %746 = vmatpush.msra.mxu0 0.0
    %747 = vmatpush.msra.mxu0 0.0
    %748 = vmatpush.msra.mxu0 0.0
    %749 = vmatpush.msra.mxu0 0.0
    %750 = vmatpush.msra.mxu0 0.0
    %751 = vmatpush.msra.mxu0 0.0
    %752 = vmatpush.msra.mxu0 0.0
    %753 = vmatpush.msra.mxu0 0.0
    %754 = vmatpush.msra.mxu0 %v736
    %755 = vmatpush.msra.mxu0 %v735
    %756 = vmatpush.msra.mxu0 %v734
    %757 = vmatpush.msra.mxu0 %v733
    %758 = vmatpush.msra.mxu0 %v732
    %759 = vmatpush.msra.mxu0 %v731
    %760 = vmatpush.msra.mxu0 %v730
    %761 = vmatpush.msra.mxu0 %v729
    %762 = vmatmul.f32.gmra.mxu0 %v741
    %v763 = vpop.f32.mrf.mxu0
    %v764 = vadd.f32 %v738, %v763
    %765 = vmatmul.f32.gmra.mxu0 %v744
    %v766 = vpop.f32.mrf.mxu0
    %v767 = vadd.f32 %v738, %v766
    %768 = vdwg.mxu0
    %v769 = vadd.f32 %v690, %v764
    %v770 = vadd.f32 %v691, %v767
    %v771 = vld [vmem:[#allocation5 + $0x90] sm:$0x1]
    %v772 = vld [vmem:[#allocation5 + $0x98] sm:$0x1]
    %v773 = vsel %vm88, %v769, 0.0
    %774 = vadd.xlane.f32.xlu0 %v773
    %v775 = vpop.xlane.xlu0 %774
    %v776 = vsel %vm88, %v770, 0.0
    %777 = vadd.xlane.f32.xlu0 %v776
    %v778 = vpop.xlane.xlu0 %777
    %v779 = vmul.f32 %v775, %v647
    %v780 = vmul.f32 %v778, %v647
    %v781 = vsub.f32 %v769, %v779
    %v782 = vsub.f32 %v770, %v780
    %v783 = vmul.f32 %v781, %v781
    %v784 = vmul.f32 %v782, %v782
    %v785 = vsel %vm88, %v783, 0.0
    %786 = vadd.xlane.f32.xlu0 %v785
    %v787 = vpop.xlane.xlu0 %786
    %v788 = vsel %vm88, %v784, 0.0
    %789 = vadd.xlane.f32.xlu0 %v788
    %v790 = vpop.xlane.xlu0 %789
    %v791 = vmul.f32 %v787, %v647
    %v792 = vmul.f32 %v790, %v647
    %v793 = vadd.f32 %v791, 1e-05
    %v794 = vadd.f32 %v792, 1e-05
    %v795 = vrsqrt.pop %v793
    %v796 = vmul.f32 %v795, %v793
    %v797 = vmul.f32 %v796, %v795
    %v798 = vmul.f32 0.5, %v797
    %v799 = vsub.f32 1.5, %v798
    %v800 = vmul.f32 %v795, %v799
    %vm801 = vweird.f32 %v793
    %vm802 = vweird.f32 %v795
    %vm803 = vmor %vm801, %vm802
    %v804 = vsel %vm803, %v795, %v800
    %v805 = vrsqrt.pop %v794
    %v806 = vmul.f32 %v805, %v794
    %v807 = vmul.f32 %v806, %v805
    %v808 = vmul.f32 0.5, %v807
    %v809 = vsub.f32 1.5, %v808
    %v810 = vmul.f32 %v805, %v809
    %vm811 = vweird.f32 %v794
    %vm812 = vweird.f32 %v805
    %vm813 = vmor %vm811, %vm812
    %v814 = vsel %vm813, %v805, %v810
    %v815 = vmul.f32 %v781, %v804
    %v816 = vmul.f32 %v782, %v814
    %v817 = vperm.slane %v771, 0
    %v818 = vmul.f32 %v815, %v817
    %v819 = vmul.f32 %v816, %v817
    %v820 = vperm.slane %v772, 0
    %v821 = vadd.f32 %v818, %v820
    %v822 = vadd.f32 %v819, %v820
    %v823 = vld [vmem:[#allocation5 + $0x110] sm:$0xff]
    %v824 = vld [vmem:[#allocation5 + $0x118] sm:$0xff]
    %v825 = vld [vmem:[#allocation5 + $0x120] sm:$0xff]
    %v826 = vld [vmem:[#allocation5 + $0x128] sm:$0xff]
    %v827 = vld [vmem:[#allocation5 + $0x130] sm:$0x1]
    %v828 = vperm.slane %v827, 0
    %v830 = vsel %vm88, %v821, 0
    %v833 = vsel %vm88, %v822, 0
    %835 = vmatpush.msra.mxu0 0.0
    %836 = vmatpush.msra.mxu0 0.0
    %837 = vmatpush.msra.mxu0 0.0
    %838 = vmatpush.msra.mxu0 0.0
    %839 = vmatpush.msra.mxu0 0.0
    %840 = vmatpush.msra.mxu0 0.0
    %841 = vmatpush.msra.mxu0 0.0
    %842 = vmatpush.msra.mxu0 0.0
    %843 = vmatpush.msra.mxu0 0.0
    %844 = vmatpush.msra.mxu0 0.0
    %845 = vmatpush.msra.mxu0 0.0
    %846 = vmatpush.msra.mxu0 0.0
    %847 = vmatpush.msra.mxu0 %v826
    %848 = vmatpush.msra.mxu0 %v825
    %849 = vmatpush.msra.mxu0 %v824
    %850 = vmatpush.msra.mxu0 %v823
    %851 = vmatmul.f32.gmra.mxu0 %v830
    %v852 = vpop.f32.mrf.mxu0
    %v853 = vadd.f32 %v828, %v852
    %854 = vmatmul.f32.gmra.mxu0 %v833
    %v855 = vpop.f32.mrf.mxu0
    %v856 = vadd.f32 %v828, %v855
    %857 = vdwg.mxu0
    %v858 = vld [vmem:[#allocation5 + $0x138] sm:$0xff]
    %v859 = vld [vmem:[#allocation5 + $0x140] sm:$0xff]
    %v860 = vld [vmem:[#allocation5 + $0x148] sm:$0xff]
    %v861 = vld [vmem:[#allocation5 + $0x150] sm:$0xff]
    %v862 = vld [vmem:[#allocation5 + $0x158] sm:$0x1]
    %865 = vrot.lane.b32.xlu0 %v853, 96
    %v866 = vpop.permute.xlu0 %865
    %867 = vrot.lane.b32.xlu0 %v856, 96
    %v868 = vpop.permute.xlu0 %867
    %v869 = vsel %vm129, %v853, 0
    %v871 = vsel %vm129, %v856, 0
    %v873 = vsel %vm129, %v866, 0
    %v875 = vsel %vm129, %v868, 0
    %877 = vmatpush.xpose.msra.mxu0 0.0
    %878 = vmatpush.xpose.msra.mxu0 0.0
    %879 = vmatpush.xpose.msra.mxu0 0.0
    %880 = vmatpush.xpose.msra.mxu0 0.0
    %881 = vmatpush.xpose.msra.mxu0 0.0
    %882 = vmatpush.xpose.msra.mxu0 0.0
    %883 = vmatpush.xpose.msra.mxu0 0.0
    %884 = vmatpush.xpose.msra.mxu0 0.0
    %885 = vmatpush.xpose.msra.mxu0 0.0
    %886 = vmatpush.xpose.msra.mxu0 0.0
    %887 = vmatpush.xpose.msra.mxu0 0.0
    %888 = vmatpush.xpose.msra.mxu0 0.0
    %889 = vmatpush.xpose.msra.mxu0 0.0
    %890 = vmatpush.xpose.msra.mxu0 0.0
    %891 = vmatpush.xpose.msra.mxu0 %v875
    %892 = vmatpush.xpose.msra.mxu0 %v873
    %893 = vmatmul.f32.gmra.mxu0 %v869
    %v894 = vpop.f32.mrf.mxu0
    %v895 = vadd.f32 %v44, %v894
    %896 = vmatmul.f32.gmra.mxu0 %v871
    %v897 = vpop.f32.mrf.mxu0
    %v898 = vadd.f32 %v45, %v897
    %899 = vdwg.mxu0
    %v900 = vsel %vm52, %v895, -inf
    %901 = vmax.xlane.f32.xlu0 %v900
    %v902 = vpop.xlane.xlu0 %901
    %v903 = vsel %vm52, %v898, -inf
    %904 = vmax.xlane.f32.xlu0 %v903
    %v905 = vpop.xlane.xlu0 %904
    %v906 = vsub.f32 %v895, %v902
    %v907 = vsub.f32 %v898, %v905
    %v908 = vmul.f32 %v906, 1.442695
    %v909 = vpow.pop %v908
    %v910 = vmul.f32 %v907, 1.442695
    %v911 = vpow.pop %v910
    %v912 = vsel %vm52, %v909, 0.0
    %913 = vadd.xlane.f32.xlu0 %v912
    %v914 = vpop.xlane.xlu0 %913
    %v915 = vsel %vm52, %v911, 0.0
    %916 = vadd.xlane.f32.xlu0 %v915
    %v917 = vpop.xlane.xlu0 %916
    %v918 = vrcp.pop %v914
    %v919 = vrcp.pop %v917
    %v920 = vmul.f32 %v909, %v918
    %v921 = vmul.f32 %v911, %v919
    %922 = vrot.lane.b32.xlu0 %v853, 64
    %v923 = vpop.permute.xlu0 %922
    %924 = vrot.lane.b32.xlu0 %v856, 64
    %v925 = vpop.permute.xlu0 %924
    %v929 = vsel %vm52, %v920, 0
    %v932 = vsel %vm52, %v921, 0
    %934 = vmatpush.msra.mxu0 0.0
    %935 = vmatpush.msra.mxu0 0.0
    %936 = vmatpush.msra.mxu0 0.0
    %937 = vmatpush.msra.mxu0 0.0
    %938 = vmatpush.msra.mxu0 0.0
    %939 = vmatpush.msra.mxu0 0.0
    %940 = vmatpush.msra.mxu0 0.0
    %941 = vmatpush.msra.mxu0 0.0
    %942 = vmatpush.msra.mxu0 0.0
    %943 = vmatpush.msra.mxu0 0.0
    %944 = vmatpush.msra.mxu0 0.0
    %945 = vmatpush.msra.mxu0 0.0
    %946 = vmatpush.msra.mxu0 0.0
    %947 = vmatpush.msra.mxu0 0.0
    %948 = vmatpush.msra.mxu0 %v925
    %949 = vmatpush.msra.mxu0 %v923
    %950 = vmatmul.f32.gmra.mxu0 %v929
    %v951 = vpop.f32.mrf.mxu0
    %v952 = vadd.f32 0.0, %v951
    %953 = vmatmul.f32.gmra.mxu0 %v932
    %v954 = vpop.f32.mrf.mxu0
    %v955 = vadd.f32 0.0, %v954
    %956 = vdwg.mxu0
    %v958 = vsel %vm129, %v952, 0
    %v961 = vsel %vm129, %v955, 0
    %963 = vmatpush.msra.mxu0 0.0
    %964 = vmatpush.msra.mxu0 0.0
    %965 = vmatpush.msra.mxu0 0.0
    %966 = vmatpush.msra.mxu0 0.0
    %967 = vmatpush.msra.mxu0 0.0
    %968 = vmatpush.msra.mxu0 0.0
    %969 = vmatpush.msra.mxu0 0.0
    %970 = vmatpush.msra.mxu0 0.0
    %971 = vmatpush.msra.mxu0 0.0
    %972 = vmatpush.msra.mxu0 0.0
    %973 = vmatpush.msra.mxu0 0.0
    %974 = vmatpush.msra.mxu0 0.0
    %975 = vmatpush.msra.mxu0 0.0
    %976 = vmatpush.msra.mxu0 0.0
    %977 = vmatpush.msra.mxu0 0.0
    %978 = vmatpush.msra.mxu0 %v858
    %979 = vmatmul.f32.gmra.mxu0 %v958
    %v980 = vpop.f32.mrf.mxu0
    %v981 = vadd.f32 0.0, %v980
    %982 = vmatmul.f32.gmra.mxu0 %v961
    %v983 = vpop.f32.mrf.mxu0
    %v984 = vadd.f32 0.0, %v983
    %985 = vdwg.mxu0
    %v986 = vperm.slane %v862, 0
    %v987 = vadd.f32 %v986, %v981
    %v988 = vadd.f32 %v986, %v984
    %989 = vrot.lane.b32.xlu0 %v853, 120
    %v990 = vpop.permute.xlu0 %989
    %991 = vrot.lane.b32.xlu0 %v856, 120
    %v992 = vpop.permute.xlu0 %991
    %993 = vrot.lane.b32.xlu0 %v853, 88
    %v994 = vpop.permute.xlu0 %993
    %995 = vrot.lane.b32.xlu0 %v856, 88
    %v996 = vpop.permute.xlu0 %995
    %v997 = vsel %vm129, %v990, 0
    %v999 = vsel %vm129, %v992, 0
    %v1001 = vsel %vm129, %v994, 0
    %v1003 = vsel %vm129, %v996, 0
    %1005 = vmatpush.xpose.msra.mxu0 0.0
    %1006 = vmatpush.xpose.msra.mxu0 0.0
    %1007 = vmatpush.xpose.msra.mxu0 0.0
    %1008 = vmatpush.xpose.msra.mxu0 0.0
    %1009 = vmatpush.xpose.msra.mxu0 0.0
    %1010 = vmatpush.xpose.msra.mxu0 0.0
    %1011 = vmatpush.xpose.msra.mxu0 0.0
    %1012 = vmatpush.xpose.msra.mxu0 0.0
    %1013 = vmatpush.xpose.msra.mxu0 0.0
    %1014 = vmatpush.xpose.msra.mxu0 0.0
    %1015 = vmatpush.xpose.msra.mxu0 0.0
    %1016 = vmatpush.xpose.msra.mxu0 0.0
    %1017 = vmatpush.xpose.msra.mxu0 0.0
    %1018 = vmatpush.xpose.msra.mxu0 0.0
    %1019 = vmatpush.xpose.msra.mxu0 %v1003
    %1020 = vmatpush.xpose.msra.mxu0 %v1001
    %1021 = vmatmul.f32.gmra.mxu0 %v997
    %v1022 = vpop.f32.mrf.mxu0
    %v1023 = vadd.f32 %v44, %v1022
    %1024 = vmatmul.f32.gmra.mxu0 %v999
    %v1025 = vpop.f32.mrf.mxu0
    %v1026 = vadd.f32 %v45, %v1025
    %1027 = vdwg.mxu0
    %v1028 = vsel %vm52, %v1023, -inf
    %1029 = vmax.xlane.f32.xlu0 %v1028
    %v1030 = vpop.xlane.xlu0 %1029
    %v1031 = vsel %vm52, %v1026, -inf
    %1032 = vmax.xlane.f32.xlu0 %v1031
    %v1033 = vpop.xlane.xlu0 %1032
    %v1034 = vsub.f32 %v1023, %v1030
    %v1035 = vsub.f32 %v1026, %v1033
    %v1036 = vmul.f32 %v1034, 1.442695
    %v1037 = vpow.pop %v1036
    %v1038 = vmul.f32 %v1035, 1.442695
    %v1039 = vpow.pop %v1038
    %v1040 = vsel %vm52, %v1037, 0.0
    %1041 = vadd.xlane.f32.xlu0 %v1040
    %v1042 = vpop.xlane.xlu0 %1041
    %v1043 = vsel %vm52, %v1039, 0.0
    %1044 = vadd.xlane.f32.xlu0 %v1043
    %v1045 = vpop.xlane.xlu0 %1044
    %v1046 = vrcp.pop %v1042
    %v1047 = vrcp.pop %v1045
    %v1048 = vmul.f32 %v1037, %v1046
    %v1049 = vmul.f32 %v1039, %v1047
    %1050 = vrot.lane.b32.xlu0 %v853, 56
    %v1051 = vpop.permute.xlu0 %1050
    %1052 = vrot.lane.b32.xlu0 %v856, 56
    %v1053 = vpop.permute.xlu0 %1052
    %v1057 = vsel %vm52, %v1048, 0
    %v1060 = vsel %vm52, %v1049, 0
    %1062 = vmatpush.msra.mxu0 0.0
    %1063 = vmatpush.msra.mxu0 0.0
    %1064 = vmatpush.msra.mxu0 0.0
    %1065 = vmatpush.msra.mxu0 0.0
    %1066 = vmatpush.msra.mxu0 0.0
    %1067 = vmatpush.msra.mxu0 0.0
    %1068 = vmatpush.msra.mxu0 0.0
    %1069 = vmatpush.msra.mxu0 0.0
    %1070 = vmatpush.msra.mxu0 0.0
    %1071 = vmatpush.msra.mxu0 0.0
    %1072 = vmatpush.msra.mxu0 0.0
    %1073 = vmatpush.msra.mxu0 0.0
    %1074 = vmatpush.msra.mxu0 0.0
    %1075 = vmatpush.msra.mxu0 0.0
    %1076 = vmatpush.msra.mxu0 %v1053
    %1077 = vmatpush.msra.mxu0 %v1051
    %1078 = vmatmul.f32.gmra.mxu0 %v1057
    %v1079 = vpop.f32.mrf.mxu0
    %v1080 = vadd.f32 0.0, %v1079
    %1081 = vmatmul.f32.gmra.mxu0 %v1060
    %v1082 = vpop.f32.mrf.mxu0
    %v1083 = vadd.f32 0.0, %v1082
    %1084 = vdwg.mxu0
    %v1086 = vsel %vm129, %v1080, 0
    %v1089 = vsel %vm129, %v1083, 0
    %1091 = vmatpush.msra.mxu0 0.0
    %1092 = vmatpush.msra.mxu0 0.0
    %1093 = vmatpush.msra.mxu0 0.0
    %1094 = vmatpush.msra.mxu0 0.0
    %1095 = vmatpush.msra.mxu0 0.0
    %1096 = vmatpush.msra.mxu0 0.0
    %1097 = vmatpush.msra.mxu0 0.0
    %1098 = vmatpush.msra.mxu0 0.0
    %1099 = vmatpush.msra.mxu0 0.0
    %1100 = vmatpush.msra.mxu0 0.0
    %1101 = vmatpush.msra.mxu0 0.0
    %1102 = vmatpush.msra.mxu0 0.0
    %1103 = vmatpush.msra.mxu0 0.0
    %1104 = vmatpush.msra.mxu0 0.0
    %1105 = vmatpush.msra.mxu0 0.0
    %1106 = vmatpush.msra.mxu0 %v859
    %1107 = vmatmul.f32.gmra.mxu0 %v1086
    %v1108 = vpop.f32.mrf.mxu0
    %v1109 = vadd.f32 0.0, %v1108
    %1110 = vmatmul.f32.gmra.mxu0 %v1089
    %v1111 = vpop.f32.mrf.mxu0
    %v1112 = vadd.f32 0.0, %v1111
    %1113 = vdwg.mxu0
    %v1114 = vadd.f32 %v987, %v1109
    %v1115 = vadd.f32 %v988, %v1112
    %1116 = vrot.lane.b32.xlu0 %v853, 112
    %v1117 = vpop.permute.xlu0 %1116
    %1118 = vrot.lane.b32.xlu0 %v856, 112
    %v1119 = vpop.permute.xlu0 %1118
    %1120 = vrot.lane.b32.xlu0 %v853, 80
    %v1121 = vpop.permute.xlu0 %1120
    %1122 = vrot.lane.b32.xlu0 %v856, 80
    %v1123 = vpop.permute.xlu0 %1122
    %v1124 = vsel %vm129, %v1117, 0
    %v1126 = vsel %vm129, %v1119, 0
    %v1128 = vsel %vm129, %v1121, 0
    %v1130 = vsel %vm129, %v1123, 0
    %1132 = vmatpush.xpose.msra.mxu0 0.0
    %1133 = vmatpush.xpose.msra.mxu0 0.0
    %1134 = vmatpush.xpose.msra.mxu0 0.0
    %1135 = vmatpush.xpose.msra.mxu0 0.0
    %1136 = vmatpush.xpose.msra.mxu0 0.0
    %1137 = vmatpush.xpose.msra.mxu0 0.0
    %1138 = vmatpush.xpose.msra.mxu0 0.0
    %1139 = vmatpush.xpose.msra.mxu0 0.0
    %1140 = vmatpush.xpose.msra.mxu0 0.0
    %1141 = vmatpush.xpose.msra.mxu0 0.0
    %1142 = vmatpush.xpose.msra.mxu0 0.0
    %1143 = vmatpush.xpose.msra.mxu0 0.0
    %1144 = vmatpush.xpose.msra.mxu0 0.0
    %1145 = vmatpush.xpose.msra.mxu0 0.0
    %1146 = vmatpush.xpose.msra.mxu0 %v1130
    %1147 = vmatpush.xpose.msra.mxu0 %v1128
    %1148 = vmatmul.f32.gmra.mxu0 %v1124
    %v1149 = vpop.f32.mrf.mxu0
    %v1150 = vadd.f32 %v44, %v1149
    %1151 = vmatmul.f32.gmra.mxu0 %v1126
    %v1152 = vpop.f32.mrf.mxu0
    %v1153 = vadd.f32 %v45, %v1152
    %1154 = vdwg.mxu0
    %v1155 = vsel %vm52, %v1150, -inf
    %1156 = vmax.xlane.f32.xlu0 %v1155
    %v1157 = vpop.xlane.xlu0 %1156
    %v1158 = vsel %vm52, %v1153, -inf
    %1159 = vmax.xlane.f32.xlu0 %v1158
    %v1160 = vpop.xlane.xlu0 %1159
    %v1161 = vsub.f32 %v1150, %v1157
    %v1162 = vsub.f32 %v1153, %v1160
    %v1163 = vmul.f32 %v1161, 1.442695
    %v1164 = vpow.pop %v1163
    %v1165 = vmul.f32 %v1162, 1.442695
    %v1166 = vpow.pop %v1165
    %v1167 = vsel %vm52, %v1164, 0.0
    %1168 = vadd.xlane.f32.xlu0 %v1167
    %v1169 = vpop.xlane.xlu0 %1168
    %v1170 = vsel %vm52, %v1166, 0.0
    %1171 = vadd.xlane.f32.xlu0 %v1170
    %v1172 = vpop.xlane.xlu0 %1171
    %v1173 = vrcp.pop %v1169
    %v1174 = vrcp.pop %v1172
    %v1175 = vmul.f32 %v1164, %v1173
    %v1176 = vmul.f32 %v1166, %v1174
    %1177 = vrot.lane.b32.xlu0 %v853, 48
    %v1178 = vpop.permute.xlu0 %1177
    %1179 = vrot.lane.b32.xlu0 %v856, 48
    %v1180 = vpop.permute.xlu0 %1179
    %v1184 = vsel %vm52, %v1175, 0
    %v1187 = vsel %vm52, %v1176, 0
    %1189 = vmatpush.msra.mxu0 0.0
    %1190 = vmatpush.msra.mxu0 0.0
    %1191 = vmatpush.msra.mxu0 0.0
    %1192 = vmatpush.msra.mxu0 0.0
    %1193 = vmatpush.msra.mxu0 0.0
    %1194 = vmatpush.msra.mxu0 0.0
    %1195 = vmatpush.msra.mxu0 0.0
    %1196 = vmatpush.msra.mxu0 0.0
    %1197 = vmatpush.msra.mxu0 0.0
    %1198 = vmatpush.msra.mxu0 0.0
    %1199 = vmatpush.msra.mxu0 0.0
    %1200 = vmatpush.msra.mxu0 0.0
    %1201 = vmatpush.msra.mxu0 0.0
    %1202 = vmatpush.msra.mxu0 0.0
    %1203 = vmatpush.msra.mxu0 %v1180
    %1204 = vmatpush.msra.mxu0 %v1178
    %1205 = vmatmul.f32.gmra.mxu0 %v1184
    %v1206 = vpop.f32.mrf.mxu0
    %v1207 = vadd.f32 0.0, %v1206
    %1208 = vmatmul.f32.gmra.mxu0 %v1187
    %v1209 = vpop.f32.mrf.mxu0
    %v1210 = vadd.f32 0.0, %v1209
    %1211 = vdwg.mxu0
    %v1213 = vsel %vm129, %v1207, 0
    %v1216 = vsel %vm129, %v1210, 0
    %1218 = vmatpush.msra.mxu0 0.0
    %1219 = vmatpush.msra.mxu0 0.0
    %1220 = vmatpush.msra.mxu0 0.0
    %1221 = vmatpush.msra.mxu0 0.0
    %1222 = vmatpush.msra.mxu0 0.0
    %1223 = vmatpush.msra.mxu0 0.0
    %1224 = vmatpush.msra.mxu0 0.0
    %1225 = vmatpush.msra.mxu0 0.0
    %1226 = vmatpush.msra.mxu0 0.0
    %1227 = vmatpush.msra.mxu0 0.0
    %1228 = vmatpush.msra.mxu0 0.0
    %1229 = vmatpush.msra.mxu0 0.0
    %1230 = vmatpush.msra.mxu0 0.0
    %1231 = vmatpush.msra.mxu0 0.0
    %1232 = vmatpush.msra.mxu0 0.0
    %1233 = vmatpush.msra.mxu0 %v860
    %1234 = vmatmul.f32.gmra.mxu0 %v1213
    %v1235 = vpop.f32.mrf.mxu0
    %v1236 = vadd.f32 0.0, %v1235
    %1237 = vmatmul.f32.gmra.mxu0 %v1216
    %v1238 = vpop.f32.mrf.mxu0
    %v1239 = vadd.f32 0.0, %v1238
    %1240 = vdwg.mxu0
    %v1241 = vadd.f32 %v1114, %v1236
    %v1242 = vadd.f32 %v1115, %v1239
    %1243 = vrot.lane.b32.xlu0 %v853, 104
    %v1244 = vpop.permute.xlu0 %1243
    %1245 = vrot.lane.b32.xlu0 %v856, 104
    %v1246 = vpop.permute.xlu0 %1245
    %1247 = vrot.lane.b32.xlu0 %v853, 72
    %v1248 = vpop.permute.xlu0 %1247
    %1249 = vrot.lane.b32.xlu0 %v856, 72
    %v1250 = vpop.permute.xlu0 %1249
    %v1251 = vsel %vm129, %v1244, 0
    %v1253 = vsel %vm129, %v1246, 0
    %v1255 = vsel %vm129, %v1248, 0
    %v1257 = vsel %vm129, %v1250, 0
    %1259 = vmatpush.xpose.msra.mxu0 0.0
    %1260 = vmatpush.xpose.msra.mxu0 0.0
    %1261 = vmatpush.xpose.msra.mxu0 0.0
    %1262 = vmatpush.xpose.msra.mxu0 0.0
    %1263 = vmatpush.xpose.msra.mxu0 0.0
    %1264 = vmatpush.xpose.msra.mxu0 0.0
    %1265 = vmatpush.xpose.msra.mxu0 0.0
    %1266 = vmatpush.xpose.msra.mxu0 0.0
    %1267 = vmatpush.xpose.msra.mxu0 0.0
    %1268 = vmatpush.xpose.msra.mxu0 0.0
    %1269 = vmatpush.xpose.msra.mxu0 0.0
    %1270 = vmatpush.xpose.msra.mxu0 0.0
    %1271 = vmatpush.xpose.msra.mxu0 0.0
    %1272 = vmatpush.xpose.msra.mxu0 0.0
    %1273 = vmatpush.xpose.msra.mxu0 %v1257
    %1274 = vmatpush.xpose.msra.mxu0 %v1255
    %1275 = vmatmul.f32.gmra.mxu0 %v1251
    %v1276 = vpop.f32.mrf.mxu0
    %v1277 = vadd.f32 %v44, %v1276
    %1278 = vmatmul.f32.gmra.mxu0 %v1253
    %v1279 = vpop.f32.mrf.mxu0
    %v1280 = vadd.f32 %v45, %v1279
    %1281 = vdwg.mxu0
    %v1282 = vsel %vm52, %v1277, -inf
    %1283 = vmax.xlane.f32.xlu0 %v1282
    %v1284 = vpop.xlane.xlu0 %1283
    %v1285 = vsel %vm52, %v1280, -inf
    %1286 = vmax.xlane.f32.xlu0 %v1285
    %v1287 = vpop.xlane.xlu0 %1286
    %v1288 = vsub.f32 %v1277, %v1284
    %v1289 = vsub.f32 %v1280, %v1287
    %v1290 = vmul.f32 %v1288, 1.442695
    %v1291 = vpow.pop %v1290
    %v1292 = vmul.f32 %v1289, 1.442695
    %v1293 = vpow.pop %v1292
    %v1294 = vsel %vm52, %v1291, 0.0
    %1295 = vadd.xlane.f32.xlu0 %v1294
    %v1296 = vpop.xlane.xlu0 %1295
    %v1297 = vsel %vm52, %v1293, 0.0
    %1298 = vadd.xlane.f32.xlu0 %v1297
    %v1299 = vpop.xlane.xlu0 %1298
    %v1300 = vrcp.pop %v1296
    %v1301 = vrcp.pop %v1299
    %v1302 = vmul.f32 %v1291, %v1300
    %v1303 = vmul.f32 %v1293, %v1301
    %1304 = vrot.lane.b32.xlu0 %v853, 40
    %v1305 = vpop.permute.xlu0 %1304
    %1306 = vrot.lane.b32.xlu0 %v856, 40
    %v1307 = vpop.permute.xlu0 %1306
    %v1311 = vsel %vm52, %v1302, 0
    %v1314 = vsel %vm52, %v1303, 0
    %1316 = vmatpush.msra.mxu0 0.0
    %1317 = vmatpush.msra.mxu0 0.0
    %1318 = vmatpush.msra.mxu0 0.0
    %1319 = vmatpush.msra.mxu0 0.0
    %1320 = vmatpush.msra.mxu0 0.0
    %1321 = vmatpush.msra.mxu0 0.0
    %1322 = vmatpush.msra.mxu0 0.0
    %1323 = vmatpush.msra.mxu0 0.0
    %1324 = vmatpush.msra.mxu0 0.0
    %1325 = vmatpush.msra.mxu0 0.0
    %1326 = vmatpush.msra.mxu0 0.0
    %1327 = vmatpush.msra.mxu0 0.0
    %1328 = vmatpush.msra.mxu0 0.0
    %1329 = vmatpush.msra.mxu0 0.0
    %1330 = vmatpush.msra.mxu0 %v1307
    %1331 = vmatpush.msra.mxu0 %v1305
    %1332 = vmatmul.f32.gmra.mxu0 %v1311
    %v1333 = vpop.f32.mrf.mxu0
    %v1334 = vadd.f32 0.0, %v1333
    %1335 = vmatmul.f32.gmra.mxu0 %v1314
    %v1336 = vpop.f32.mrf.mxu0
    %v1337 = vadd.f32 0.0, %v1336
    %1338 = vdwg.mxu0
    %v1340 = vsel %vm129, %v1334, 0
    %v1343 = vsel %vm129, %v1337, 0
    %1345 = vmatpush.msra.mxu0 0.0
    %1346 = vmatpush.msra.mxu0 0.0
    %1347 = vmatpush.msra.mxu0 0.0
    %1348 = vmatpush.msra.mxu0 0.0
    %1349 = vmatpush.msra.mxu0 0.0
    %1350 = vmatpush.msra.mxu0 0.0
    %1351 = vmatpush.msra.mxu0 0.0
    %1352 = vmatpush.msra.mxu0 0.0
    %1353 = vmatpush.msra.mxu0 0.0
    %1354 = vmatpush.msra.mxu0 0.0
    %1355 = vmatpush.msra.mxu0 0.0
    %1356 = vmatpush.msra.mxu0 0.0
    %1357 = vmatpush.msra.mxu0 0.0
    %1358 = vmatpush.msra.mxu0 0.0
    %1359 = vmatpush.msra.mxu0 0.0
    %1360 = vmatpush.msra.mxu0 %v861
    %1361 = vmatmul.f32.gmra.mxu0 %v1340
    %v1362 = vpop.f32.mrf.mxu0
    %v1363 = vadd.f32 0.0, %v1362
    %1364 = vmatmul.f32.gmra.mxu0 %v1343
    %v1365 = vpop.f32.mrf.mxu0
    %v1366 = vadd.f32 0.0, %v1365
    %1367 = vdwg.mxu0
    %v1368 = vadd.f32 %v1241, %v1363
    %v1369 = vadd.f32 %v1242, %v1366
    %v1370 = vadd.f32 %v821, %v1368
    %v1371 = vadd.f32 %v822, %v1369
    %v1372 = vld [vmem:[#allocation5 + $0x160] sm:$0x1]
    %v1373 = vld [vmem:[#allocation5 + $0x168] sm:$0x1]
    %v1374 = vsel %vm88, %v1370, 0.0
    %1375 = vadd.xlane.f32.xlu0 %v1374
    %v1376 = vpop.xlane.xlu0 %1375
    %v1377 = vsel %vm88, %v1371, 0.0
    %1378 = vadd.xlane.f32.xlu0 %v1377
    %v1379 = vpop.xlane.xlu0 %1378
    %v1380 = vmul.f32 %v1376, %v647
    %v1381 = vmul.f32 %v1379, %v647
    %v1382 = vsub.f32 %v1370, %v1380
    %v1383 = vsub.f32 %v1371, %v1381
    %v1384 = vmul.f32 %v1382, %v1382
    %v1385 = vmul.f32 %v1383, %v1383
    %v1386 = vsel %vm88, %v1384, 0.0
    %1387 = vadd.xlane.f32.xlu0 %v1386
    %v1388 = vpop.xlane.xlu0 %1387
    %v1389 = vsel %vm88, %v1385, 0.0
    %1390 = vadd.xlane.f32.xlu0 %v1389
    %v1391 = vpop.xlane.xlu0 %1390
    %v1392 = vmul.f32 %v1388, %v647
    %v1393 = vmul.f32 %v1391, %v647
    %v1394 = vadd.f32 %v1392, 1e-05
    %v1395 = vadd.f32 %v1393, 1e-05
    %v1396 = vrsqrt.pop %v1394
    %v1397 = vmul.f32 %v1396, %v1394
    %v1398 = vmul.f32 %v1397, %v1396
    %v1399 = vmul.f32 0.5, %v1398
    %v1400 = vsub.f32 1.5, %v1399
    %v1401 = vmul.f32 %v1396, %v1400
    %vm1402 = vweird.f32 %v1394
    %vm1403 = vweird.f32 %v1396
    %vm1404 = vmor %vm1402, %vm1403
    %v1405 = vsel %vm1404, %v1396, %v1401
    %v1406 = vrsqrt.pop %v1395
    %v1407 = vmul.f32 %v1406, %v1395
    %v1408 = vmul.f32 %v1407, %v1406
    %v1409 = vmul.f32 0.5, %v1408
    %v1410 = vsub.f32 1.5, %v1409
    %v1411 = vmul.f32 %v1406, %v1410
    %vm1412 = vweird.f32 %v1395
    %vm1413 = vweird.f32 %v1406
    %vm1414 = vmor %vm1412, %vm1413
    %v1415 = vsel %vm1414, %v1406, %v1411
    %v1416 = vmul.f32 %v1382, %v1405
    %v1417 = vmul.f32 %v1383, %v1415
    %v1418 = vperm.slane %v1372, 0
    %v1419 = vmul.f32 %v1416, %v1418
    %v1420 = vmul.f32 %v1417, %v1418
    %v1421 = vperm.slane %v1373, 0
    %v1422 = vadd.f32 %v1419, %v1421
    %v1423 = vadd.f32 %v1420, %v1421
    %v1424 = vld [vmem:[#allocation5 + $0x180] sm:$0xff]
    %v1425 = vld [vmem:[#allocation5 + $0x188] sm:$0xff]
    %v1426 = vld [vmem:[#allocation5 + $0x190] sm:$0xff]
    %v1427 = vld [vmem:[#allocation5 + $0x198] sm:$0xff]
    %v1428 = vld [vmem:[#allocation5 + $0x1a0] sm:$0x1]
    %v1429 = vperm.slane %v1428, 0
    %v1431 = vsel %vm88, %v1422, 0
    %v1434 = vsel %vm88, %v1423, 0
    %1436 = vmatpush.msra.mxu0 0.0
    %1437 = vmatpush.msra.mxu0 0.0
    %1438 = vmatpush.msra.mxu0 0.0
    %1439 = vmatpush.msra.mxu0 0.0
    %1440 = vmatpush.msra.mxu0 0.0
    %1441 = vmatpush.msra.mxu0 0.0
    %1442 = vmatpush.msra.mxu0 0.0
    %1443 = vmatpush.msra.mxu0 0.0
    %1444 = vmatpush.msra.mxu0 0.0
    %1445 = vmatpush.msra.mxu0 0.0
    %1446 = vmatpush.msra.mxu0 0.0
    %1447 = vmatpush.msra.mxu0 0.0
    %1448 = vmatpush.msra.mxu0 %v1427
    %1449 = vmatpush.msra.mxu0 %v1426
    %1450 = vmatpush.msra.mxu0 %v1425
    %1451 = vmatpush.msra.mxu0 %v1424
    %1452 = vmatmul.f32.gmra.mxu0 %v1431
    %v1453 = vpop.f32.mrf.mxu0
    %v1454 = vadd.f32 %v1429, %v1453
    %1455 = vmatmul.f32.gmra.mxu0 %v1434
    %v1456 = vpop.f32.mrf.mxu0
    %v1457 = vadd.f32 %v1429, %v1456
    %1458 = vdwg.mxu0
    %v1459 = vmax.f32 %v1454, 0.0
    %v1460 = vmax.f32 %v1457, 0.0
    %v1461 = vld [vmem:[#allocation5 + $0x1a8] sm:$0xff]
    %v1462 = vld [vmem:[#allocation5 + $0x1b0] sm:$0xff]
    %v1463 = vld [vmem:[#allocation5 + $0x1b8] sm:$0xff]
    %v1464 = vld [vmem:[#allocation5 + $0x1c0] sm:$0xff]
    %v1465 = vld [vmem:[#allocation5 + $0x1c8] sm:$0xff]
    %v1466 = vld [vmem:[#allocation5 + $0x1d0] sm:$0xff]
    %v1467 = vld [vmem:[#allocation5 + $0x1d8] sm:$0xff]
    %v1468 = vld [vmem:[#allocation5 + $0x1e0] sm:$0xff]
    %v1469 = vld [vmem:[#allocation5 + $0x1e8] sm:$0x1]
    %v1470 = vperm.slane %v1469, 0
    %v1472 = vsel %vm739, %v1459, 0
    %v1475 = vsel %vm739, %v1460, 0
    %1477 = vmatpush.msra.mxu0 0.0
    %1478 = vmatpush.msra.mxu0 0.0
    %1479 = vmatpush.msra.mxu0 0.0
    %1480 = vmatpush.msra.mxu0 0.0
    %1481 = vmatpush.msra.mxu0 0.0
    %1482 = vmatpush.msra.mxu0 0.0
    %1483 = vmatpush.msra.mxu0 0.0
    %1484 = vmatpush.msra.mxu0 0.0
    %1485 = vmatpush.msra.mxu0 %v1468
    %1486 = vmatpush.msra.mxu0 %v1467
    %1487 = vmatpush.msra.mxu0 %v1466
    %1488 = vmatpush.msra.mxu0 %v1465
    %1489 = vmatpush.msra.mxu0 %v1464
    %1490 = vmatpush.msra.mxu0 %v1463
    %1491 = vmatpush.msra.mxu0 %v1462
    %1492 = vmatpush.msra.mxu0 %v1461
    %1493 = vmatmul.f32.gmra.mxu0 %v1472
    %v1494 = vpop.f32.mrf.mxu0
    %v1495 = vadd.f32 %v1470, %v1494
    %1496 = vmatmul.f32.gmra.mxu0 %v1475
    %v1497 = vpop.f32.mrf.mxu0
    %v1498 = vadd.f32 %v1470, %v1497
    %1499 = vdwg.mxu0
    %v1500 = vadd.f32 %v1422, %v1495
    %v1501 = vadd.f32 %v1423, %v1498
    %v1502 = vld [vmem:[#allocation5 + $0x170] sm:$0x1]
    %v1503 = vld [vmem:[#allocation5 + $0x178] sm:$0x1]
    %v1504 = vsel %vm88, %v1500, 0.0
    %1505 = vadd.xlane.f32.xlu0 %v1504
    %v1506 = vpop.xlane.xlu0 %1505
    %v1507 = vsel %vm88, %v1501, 0.0
    %1508 = vadd.xlane.f32.xlu0 %v1507
    %v1509 = vpop.xlane.xlu0 %1508
    %v1510 = vmul.f32 %v1506, %v647
    %v1511 = vmul.f32 %v1509, %v647
    %v1512 = vsub.f32 %v1500, %v1510
    %v1513 = vsub.f32 %v1501, %v1511
    %v1514 = vmul.f32 %v1512, %v1512
    %v1515 = vmul.f32 %v1513, %v1513
    %v1516 = vsel %vm88, %v1514, 0.0
    %1517 = vadd.xlane.f32.xlu0 %v1516
    %v1518 = vpop.xlane.xlu0 %1517
    %v1519 = vsel %vm88, %v1515, 0.0
    %1520 = vadd.xlane.f32.xlu0 %v1519
    %v1521 = vpop.xlane.xlu0 %1520
    %v1522 = vmul.f32 %v1518, %v647
    %v1523 = vmul.f32 %v1521, %v647
    %v1524 = vadd.f32 %v1522, 1e-05
    %v1525 = vadd.f32 %v1523, 1e-05
    %v1526 = vrsqrt.pop %v1524
    %v1527 = vmul.f32 %v1526, %v1524
    %v1528 = vmul.f32 %v1527, %v1526
    %v1529 = vmul.f32 0.5, %v1528
    %v1530 = vsub.f32 1.5, %v1529
    %v1531 = vmul.f32 %v1526, %v1530
    %vm1532 = vweird.f32 %v1524
    %vm1533 = vweird.f32 %v1526
    %vm1534 = vmor %vm1532, %vm1533
    %v1535 = vsel %vm1534, %v1526, %v1531
    %v1536 = vrsqrt.pop %v1525
    %v1537 = vmul.f32 %v1536, %v1525
    %v1538 = vmul.f32 %v1537, %v1536
    %v1539 = vmul.f32 0.5, %v1538
    %v1540 = vsub.f32 1.5, %v1539
    %v1541 = vmul.f32 %v1536, %v1540
    %vm1542 = vweird.f32 %v1525
    %vm1543 = vweird.f32 %v1536
    %vm1544 = vmor %vm1542, %vm1543
    %v1545 = vsel %vm1544, %v1536, %v1541
    %v1546 = vmul.f32 %v1512, %v1535
    %v1547 = vmul.f32 %v1513, %v1545
    %v1548 = vperm.slane %v1502, 0
    %v1549 = vmul.f32 %v1546, %v1548
    %v1550 = vmul.f32 %v1547, %v1548
    %v1551 = vperm.slane %v1503, 0
    %v1552 = vadd.f32 %v1549, %v1551
    %v1553 = vadd.f32 %v1550, %v1551
    %v1555 = vrot.slane %v1552, 7
    %v1558 = vrot.slane %v1553, 6
    %vm1560 = vcmask 1040384
    %v1561 = vsel %vm1560, %v1555, %v1558
    %v1562 = vld [vmem:[#allocation5 + $0x1f0] sm:$0xff]
    %v1563 = vld [vmem:[#allocation5 + $0x1f8] sm:$0xff]
    %v1564 = vld [vmem:[#allocation5 + $0x200] sm:$0xff]
    %v1565 = vld [vmem:[#allocation5 + $0x208] sm:$0xff]
    %v1566 = vld [vmem:[#allocation5 + $0x210] sm:$0x1]
    %v1567 = vperm.slane %v1566, 0
    %v1569 = vsel %vm88, %v1561, 0
    %1571 = vmatpush.msra.mxu0 0.0
    %1572 = vmatpush.msra.mxu0 0.0
    %1573 = vmatpush.msra.mxu0 0.0
    %1574 = vmatpush.msra.mxu0 0.0
    %1575 = vmatpush.msra.mxu0 0.0
    %1576 = vmatpush.msra.mxu0 0.0
    %1577 = vmatpush.msra.mxu0 0.0
    %1578 = vmatpush.msra.mxu0 0.0
    %1579 = vmatpush.msra.mxu0 0.0
    %1580 = vmatpush.msra.mxu0 0.0
    %1581 = vmatpush.msra.mxu0 0.0
    %1582 = vmatpush.msra.mxu0 0.0
    %1583 = vmatpush.msra.mxu0 %v1565
    %1584 = vmatpush.msra.mxu0 %v1564
    %1585 = vmatpush.msra.mxu0 %v1563
    %1586 = vmatpush.msra.mxu0 %v1562
    %1587 = vmatmul.f32.gmra.mxu0 %v1569
    %v1588 = vpop.f32.mrf.mxu0
    %v1589 = vadd.f32 %v1567, %v1588
    %1590 = vdwg.mxu0
    %vm1591 = vcmask 58368
    %1592 = vst.msk [vmem:[#allocation7] sm:$0x3] %vm1591, %v1589
    // Predicated region
    $region18: #{tpu_custom_call.1} parent=1 // pred_check
      _
    $region19: #{tpu_custom_call.1} parent=1 // pred_check_branch
      %1594 = sbr.rel (0) target = $region21
    $region20: #{tpu_custom_call.1} parent=1 // pred_region
      %1596 = vsyncadd [#allocation4], 0
      %s1598 = sshll.u32 [#allocation7], 4
      %s1599 = int_to_ptr.vmem [resolvable:$true] %s1598
      %s1600 = sshll.u32 %s2, 4
      %s1601 = int_to_ptr.hbm [resolvable:$true] %s1600
      %1603 = dma.vmem_to_hbm [thread:$0]  %s1599, 32, %s1601, [#allocation4]
    $region21: #{tpu_custom_call.1} parent=1 // pred_fallthru
      _
    // Predicated region
    $region22: #{tpu_custom_call.1} parent=1 // pred_check
      _
    $region23: #{tpu_custom_call.1} parent=1 // pred_check_branch
      %1605 = sbr.rel (0) target = $region25
    $region24: #{tpu_custom_call.1} parent=1 // pred_region
      %1607 = dma.done [#allocation4], 32
    $region25: #{tpu_custom_call.1} parent=1 // pred_fallthru
      _
    %1608 = vsyncpa [#allocation3], 1
    %1609 = vsyncpa [#allocation6], 1
    %1610 = vsyncpa [#allocation4], 1

</llo_original>
